<compile_context>
chip_gen: v6e
topology: v6e:2x2x1
jax: 0.10.0
libtpu: 0.0.40
codegen_flags: <defaults>
</compile_context>

<pallas_src>
import jax
import jax.numpy as jnp
from jax import lax
from jax.experimental import pallas as pl
from jax.experimental.pallas import tpu as pltpu


def colornet_kernel(x_ref,
                    w1_ref, b1_ref,
                    w2_ref, b2_ref,
                    w3_ref, b3_ref,
                    w4_ref, b4_ref,
                    o_ref):
    """One batch tile: x_ref (tn, 5) row-major in, o_ref (tn, 5) row-major out.

    Weights are PyTorch layout (out, in); biases are (out, 1) column vectors that
    lane-broadcast against the feature-major (out, tn) activations.
    """
    cdt = w1_ref.dtype                      # matmul-input dtype (bf16 by default)
    x = x_ref[...].astype(cdt)              # (tn, 5) batch-major, as stored in HBM

    # Layer 1: contract the feature dim of the batch-major tile directly against
    # W1's input dim -> feature-major (25, tn).  (W1 @ x^T without materializing
    # x^T; the MXU handles the transposed-RHS contraction.)
    z1 = lax.dot_general(w1_ref[...], x, (((1,), (1,)), ((), ())),
                         preferred_element_type=jnp.float32)
    h = jnp.tanh(z1 + b1_ref[...])          # (25, tn) f32

    # Layers 2-3: plain feature-major matmuls, f32 accumulation.
    h = jnp.tanh(jnp.dot(w2_ref[...], h.astype(cdt),
                         preferred_element_type=jnp.float32) + b2_ref[...])
    h = jnp.tanh(jnp.dot(w3_ref[...], h.astype(cdt),
                         preferred_element_type=jnp.float32) + b3_ref[...])

    # Layer 4 stays feature-major (only 5 output rows stream through the MXU and
    # the tanh needs just tn/128 EUP pushes) ...
    h = jnp.tanh(jnp.dot(w4_ref[...], h.astype(cdt),
                         preferred_element_type=jnp.float32) + b4_ref[...])  # (5, tn)

    # ... and the (5, tn) -> (tn, 5) relayout for the row-major store runs on the
    # otherwise-idle XLU.
    o_ref[...] = jnp.transpose(h).astype(o_ref.dtype)


def colornet_forward(x, params, *, tn=8192, dot_dtype=jnp.bfloat16):
    """Apply ColorNet to x of shape (N, 5) float32, returning (N, 5).

    params: PyTorch-layout parameters: w* of shape (out, in), b* of shape (out,).
    tn: batch-tile height (rows per grid step).  Multiple of 8 required; multiples
        of 512 recommended.  Any N works: the last block is partial/masked.
    dot_dtype: storage/matmul-input dtype for the weights (bf16 by default for the
        bf16-native MXUs on v6e/v7x; accumulation is always f32).  Use jnp.float32
        for strict parity with an f32 reference.
    """
    N, din = x.shape
    assert din == 5
    if tn > N:                               # don't build a block bigger than the data
        tn = max(8, ((N + 7) // 8) * 8)
    assert tn % 8 == 0, "tn must be a multiple of 8 (sublane granularity)"

    grid = (pl.cdiv(N, tn),)                 # masked partial last block; no jnp.pad

    w1 = params["w1"].astype(dot_dtype)                      # (25, 5)
    w2 = params["w2"].astype(dot_dtype)                      # (25, 25)
    w3 = params["w3"].astype(dot_dtype)                      # (25, 25)
    w4 = params["w4"].astype(dot_dtype)                      # (5, 25)
    b1 = params["b1"].reshape(-1, 1).astype(jnp.float32)     # (25, 1)
    b2 = params["b2"].reshape(-1, 1).astype(jnp.float32)     # (25, 1)
    b3 = params["b3"].reshape(-1, 1).astype(jnp.float32)     # (25, 1)
    b4 = params["b4"].reshape(-1, 1).astype(jnp.float32)     # (5, 1)

    # ~3-6 KB of parameters: whole-array VMEM-resident for the entire call instead
    # of 8 per-step pipelined DMA streams.
    resident = pl.BlockSpec(memory_space=pltpu.MemorySpace.VMEM)

    return pl.pallas_call(
        colornet_kernel,
        out_shape=jax.ShapeDtypeStruct((N, 5), x.dtype),
        grid_spec=pltpu.PrefetchScalarGridSpec(
            num_scalar_prefetch=0,
            grid=grid,
            in_specs=[
                # (tn, 5): 2nd-minor divisible by 8, minor equals the full dim (legal),
                # and the HBM side of each block is one contiguous run of full rows.
                pl.BlockSpec((tn, 5), lambda i: (i, 0)),
                resident, resident,                        # w1, b1
                resident, resident,                        # w2, b2
                resident, resident,                        # w3, b3
                resident, resident,                        # w4, b4
            ],
            out_specs=pl.BlockSpec((tn, 5), lambda i: (i, 0)),
        ),
        compiler_params=pltpu.CompilerParams(
            dimension_semantics=("parallel",)),   # shard batch tiles across TCs on v7x
    )(x, w1, b1, w2, b2, w3, b3, w4, b4)


def init_params(key):
    """Deterministic synthetic init matching nn.Linear shapes/init.

    PyTorch nn.Linear stores weight as (out_features, in_features) and bias as
    (out_features,); the kernel computes W @ h + b in that same layout.
    """
    def linear(key, din, dout):
        kw, kb = jax.random.split(key)
        bound = 1.0 / jnp.sqrt(din)
        w = jax.random.uniform(kw, (dout, din), jnp.float32, -bound, bound)
        b = jax.random.uniform(kb, (dout,), jnp.float32, -bound, bound)
        return w, b

    k1, k2, k3, k4 = jax.random.split(key, 4)
    w1, b1 = linear(k1, 5, 25)
    w2, b2 = linear(k2, 25, 25)
    w3, b3 = linear(k3, 25, 25)
    w4, b4 = linear(k4, 25, 5)
    return dict(w1=w1, b1=b1, w2=w2, b2=b2, w3=w3, b3=b3, w4=w4, b4=b4)


def colornet_ref(x, p):
    """Pure-JAX f32 reference, mathematically identical to the PyTorch module:
    tanh(x @ W.T + b) == tanh(W @ x.T + b[:, None]).T with W stored as (out, in)."""
    h = x.T
    for wk, bk in (("w1", "b1"), ("w2", "b2"), ("w3", "b3"), ("w4", "b4")):
        h = jnp.tanh(p[wk] @ h + p[bk][:, None])
    return h.T


if __name__ == "__main__":
    key = jax.random.PRNGKey(0)
    kparams, kx = jax.random.split(key)
    params = init_params(kparams)

    # Small example; N deliberately NOT a multiple of the tile so the masked
    # partial-last-block path is exercised, and tn chosen so the grid has 3 steps.
    N = 1200
    x = jax.random.uniform(kx, (N, 5), jnp.float32)
    ref = colornet_ref(x, params)

    # Default bf16-weight path (review-recommended for the bf16-native MXUs).
    out_bf16 = jax.block_until_ready(colornet_forward(x, params, tn=512))
    assert out_bf16.shape == (N, 5)
    err_bf16 = float(jnp.max(jnp.abs(out_bf16 - ref)))
    # bf16 weight/activation storage through 4 tanh layers: allow a few e-2 abs
    # (outputs are bounded by tanh to (-1, 1)).
    assert err_bf16 < 5e-2, f"bf16 path max abs err too large: {err_bf16}"

    # Strict f32 path: should match the f32 reference tightly.
    out_f32 = jax.block_until_ready(
        colornet_forward(x, params, tn=512, dot_dtype=jnp.float32))
    err_f32 = float(jnp.max(jnp.abs(out_f32 - ref)))
    assert jnp.allclose(out_f32, ref, atol=1e-3, rtol=1e-3), err_f32

    print("KERNEL_OK")
</pallas_src>

<mosaic_0001>
module attributes {stable_mosaic.version = 11 : i64} {
  func.func @colornet_kernel(%arg0: i32, %arg1: memref<512x5xf32, #tpu.memory_space<vmem>>, %arg2: memref<25x5xbf16, #tpu.memory_space<vmem>>, %arg3: memref<25x1xf32, #tpu.memory_space<vmem>>, %arg4: memref<25x25xbf16, #tpu.memory_space<vmem>>, %arg5: memref<25x1xf32, #tpu.memory_space<vmem>>, %arg6: memref<25x25xbf16, #tpu.memory_space<vmem>>, %arg7: memref<25x1xf32, #tpu.memory_space<vmem>>, %arg8: memref<5x25xbf16, #tpu.memory_space<vmem>>, %arg9: memref<5x1xf32, #tpu.memory_space<vmem>>, %arg10: memref<512x5xf32, #tpu.memory_space<vmem>>) attributes {dimension_semantics = [#tpu.dimension_semantics<parallel>], iteration_bounds = array<i64: 3>, scalar_prefetch = 0 : i64, scratch_operands = 0 : i64, tpu.core_type = #tpu.core_type<tc>, window_params = [{transform_indices = @transform_0, window_bounds = array<i64: 512, 5>}, {pipeline_mode = #tpu.pipeline_mode<synchronous>, transform_indices = @transform_1, window_bounds = array<i64: 25, 5>}, {pipeline_mode = #tpu.pipeline_mode<synchronous>, transform_indices = @transform_2, window_bounds = array<i64: 25, 1>}, {pipeline_mode = #tpu.pipeline_mode<synchronous>, transform_indices = @transform_3, window_bounds = array<i64: 25, 25>}, {pipeline_mode = #tpu.pipeline_mode<synchronous>, transform_indices = @transform_4, window_bounds = array<i64: 25, 1>}, {pipeline_mode = #tpu.pipeline_mode<synchronous>, transform_indices = @transform_5, window_bounds = array<i64: 25, 25>}, {pipeline_mode = #tpu.pipeline_mode<synchronous>, transform_indices = @transform_6, window_bounds = array<i64: 25, 1>}, {pipeline_mode = #tpu.pipeline_mode<synchronous>, transform_indices = @transform_7, window_bounds = array<i64: 5, 25>}, {pipeline_mode = #tpu.pipeline_mode<synchronous>, transform_indices = @transform_8, window_bounds = array<i64: 5, 1>}, {transform_indices = @transform_9, window_bounds = array<i64: 512, 5>}]} {
    %c0 = arith.constant 0 : index
    %c0_0 = arith.constant 0 : index
    %0 = vector.load %arg1[%c0, %c0_0] : memref<512x5xf32, #tpu.memory_space<vmem>>, vector<512x5xf32>
    %1 = arith.truncf %0 : vector<512x5xf32> to vector<512x5xbf16>
    %c0_1 = arith.constant 0 : index
    %c0_2 = arith.constant 0 : index
    %2 = vector.load %arg2[%c0_1, %c0_2] : memref<25x5xbf16, #tpu.memory_space<vmem>>, vector<25x5xbf16>
    %cst = arith.constant dense<0.000000e+00> : vector<25x512xf32>
    %3 = tpu.matmul %2, %1, %cst {dimension_numbers = #tpu.dot_dimension_numbers<[1], [1], [0], [0], [0, 0, 1, 0], [], []>} : vector<25x5xbf16>, vector<512x5xbf16>, vector<25x512xf32> -> vector<25x512xf32>
    %c0_3 = arith.constant 0 : index
    %c0_4 = arith.constant 0 : index
    %4 = vector.load %arg3[%c0_3, %c0_4] : memref<25x1xf32, #tpu.memory_space<vmem>>, vector<25x1xf32>
    %5 = vector.broadcast %4 : vector<25x1xf32> to vector<25x512xf32>
    %6 = arith.addf %3, %5 : vector<25x512xf32>
    %7 = math.tanh %6 : vector<25x512xf32>
    %c0_5 = arith.constant 0 : index
    %c0_6 = arith.constant 0 : index
    %8 = vector.load %arg4[%c0_5, %c0_6] : memref<25x25xbf16, #tpu.memory_space<vmem>>, vector<25x25xbf16>
    %9 = arith.truncf %7 : vector<25x512xf32> to vector<25x512xbf16>
    %cst_7 = arith.constant dense<0.000000e+00> : vector<25x512xf32>
    %10 = tpu.matmul %8, %9, %cst_7 {dimension_numbers = #tpu.dot_dimension_numbers<[1], [0], [0], [1], [0, 0, 1, 1], [], []>} : vector<25x25xbf16>, vector<25x512xbf16>, vector<25x512xf32> -> vector<25x512xf32>
    %c0_8 = arith.constant 0 : index
    %c0_9 = arith.constant 0 : index
    %11 = vector.load %arg5[%c0_8, %c0_9] : memref<25x1xf32, #tpu.memory_space<vmem>>, vector<25x1xf32>
    %12 = vector.broadcast %11 : vector<25x1xf32> to vector<25x512xf32>
    %13 = arith.addf %10, %12 : vector<25x512xf32>
    %14 = math.tanh %13 : vector<25x512xf32>
    %c0_10 = arith.constant 0 : index
    %c0_11 = arith.constant 0 : index
    %15 = vector.load %arg6[%c0_10, %c0_11] : memref<25x25xbf16, #tpu.memory_space<vmem>>, vector<25x25xbf16>
    %16 = arith.truncf %14 : vector<25x512xf32> to vector<25x512xbf16>
    %cst_12 = arith.constant dense<0.000000e+00> : vector<25x512xf32>
    %17 = tpu.matmul %15, %16, %cst_12 {dimension_numbers = #tpu.dot_dimension_numbers<[1], [0], [0], [1], [0, 0, 1, 1], [], []>} : vector<25x25xbf16>, vector<25x512xbf16>, vector<25x512xf32> -> vector<25x512xf32>
    %c0_13 = arith.constant 0 : index
    %c0_14 = arith.constant 0 : index
    %18 = vector.load %arg7[%c0_13, %c0_14] : memref<25x1xf32, #tpu.memory_space<vmem>>, vector<25x1xf32>
    %19 = vector.broadcast %18 : vector<25x1xf32> to vector<25x512xf32>
    %20 = arith.addf %17, %19 : vector<25x512xf32>
    %21 = math.tanh %20 : vector<25x512xf32>
    %c0_15 = arith.constant 0 : index
    %c0_16 = arith.constant 0 : index
    %22 = vector.load %arg8[%c0_15, %c0_16] : memref<5x25xbf16, #tpu.memory_space<vmem>>, vector<5x25xbf16>
    %23 = arith.truncf %21 : vector<25x512xf32> to vector<25x512xbf16>
    %cst_17 = arith.constant dense<0.000000e+00> : vector<5x512xf32>
    %24 = tpu.matmul %22, %23, %cst_17 {dimension_numbers = #tpu.dot_dimension_numbers<[1], [0], [0], [1], [0, 0, 1, 1], [], []>} : vector<5x25xbf16>, vector<25x512xbf16>, vector<5x512xf32> -> vector<5x512xf32>
    %c0_18 = arith.constant 0 : index
    %c0_19 = arith.constant 0 : index
    %25 = vector.load %arg9[%c0_18, %c0_19] : memref<5x1xf32, #tpu.memory_space<vmem>>, vector<5x1xf32>
    %26 = vector.broadcast %25 : vector<5x1xf32> to vector<5x512xf32>
    %27 = arith.addf %24, %26 : vector<5x512xf32>
    %28 = math.tanh %27 : vector<5x512xf32>
    %29 = tpu.transpose %28, [1, 0] : vector<5x512xf32> -> vector<512x5xf32>
    %c0_20 = arith.constant 0 : index
    %c0_21 = arith.constant 0 : index
    %30 = vector.load %arg10[%c0_20, %c0_21] : memref<512x5xf32, #tpu.memory_space<vmem>>, vector<512x5xf32>
    tpu.vector_store %arg10[%c0_20, %c0_21], %29 {strides = array<i32>} : memref<512x5xf32, #tpu.memory_space<vmem>>, vector<512x5xf32>,
    return
  }
  func.func @transform_0(%arg0: i32) -> (i32, i32) {
    %c0_i32 = arith.constant 0 : i32
    %c0_i32_0 = arith.constant 0 : i32
    return %arg0, %c0_i32 : i32, i32
  }
  func.func @transform_1(%arg0: i32) -> (i32, i32) {
    %c0_i32 = arith.constant 0 : i32
    %c0_i32_0 = arith.constant 0 : i32
    %c0_i32_1 = arith.constant 0 : i32
    return %c0_i32, %c0_i32_0 : i32, i32
  }
  func.func @transform_2(%arg0: i32) -> (i32, i32) {
    %c0_i32 = arith.constant 0 : i32
    %c0_i32_0 = arith.constant 0 : i32
    %c0_i32_1 = arith.constant 0 : i32
    return %c0_i32, %c0_i32_0 : i32, i32
  }
  func.func @transform_3(%arg0: i32) -> (i32, i32) {
    %c0_i32 = arith.constant 0 : i32
    %c0_i32_0 = arith.constant 0 : i32
    %c0_i32_1 = arith.constant 0 : i32
    return %c0_i32, %c0_i32_0 : i32, i32
  }
  func.func @transform_4(%arg0: i32) -> (i32, i32) {
    %c0_i32 = arith.constant 0 : i32
    %c0_i32_0 = arith.constant 0 : i32
    %c0_i32_1 = arith.constant 0 : i32
    return %c0_i32, %c0_i32_0 : i32, i32
  }
  func.func @transform_5(%arg0: i32) -> (i32, i32) {
    %c0_i32 = arith.constant 0 : i32
    %c0_i32_0 = arith.constant 0 : i32
    %c0_i32_1 = arith.constant 0 : i32
    return %c0_i32, %c0_i32_0 : i32, i32
  }
  func.func @transform_6(%arg0: i32) -> (i32, i32) {
    %c0_i32 = arith.constant 0 : i32
    %c0_i32_0 = arith.constant 0 : i32
    %c0_i32_1 = arith.constant 0 : i32
    return %c0_i32, %c0_i32_0 : i32, i32
  }
  func.func @transform_7(%arg0: i32) -> (i32, i32) {
    %c0_i32 = arith.constant 0 : i32
    %c0_i32_0 = arith.constant 0 : i32
    %c0_i32_1 = arith.constant 0 : i32
    return %c0_i32, %c0_i32_0 : i32, i32
  }
  func.func @transform_8(%arg0: i32) -> (i32, i32) {
    %c0_i32 = arith.constant 0 : i32
    %c0_i32_0 = arith.constant 0 : i32
    %c0_i32_1 = arith.constant 0 : i32
    return %c0_i32, %c0_i32_0 : i32, i32
  }
  func.func @transform_9(%arg0: i32) -> (i32, i32) {
    %c0_i32 = arith.constant 0 : i32
    %c0_i32_0 = arith.constant 0 : i32
    return %arg0, %c0_i32 : i32, i32
  }
}

</mosaic_0001>

<llo_original>
// kernel: tpu_custom_call.1
$region0: #{tpu_custom_call.1}
  #allocation0 [shape = 'u32[]', space=smem, size = 0x4, offset = 0x4, fixed_abs, tag = 'smem constant byte address 0x4 - core index']
  #allocation1 [shape = 'u32[144,128]{1,0:T(1,128)}', space=vmem, size = 0x12000, scoped, tag = 'internal scratch']
  %s0 = inlined_call_operand.vmem [shape: f32[1200,5], index: 0, kind: input, shape index: {}]
  %s1 = inlined_call_operand.vmem [shape: bf16[25,5], index: 1, kind: input, shape index: {}]
  %s2 = inlined_call_operand.vmem [shape: f32[25,1], index: 2, kind: input, shape index: {}]
  %s3 = inlined_call_operand.vmem [shape: bf16[25,25], index: 3, kind: input, shape index: {}]
  %s4 = inlined_call_operand.vmem [shape: f32[25,1], index: 4, kind: input, shape index: {}]
  %s5 = inlined_call_operand.vmem [shape: bf16[25,25], index: 5, kind: input, shape index: {}]
  %s6 = inlined_call_operand.vmem [shape: f32[25,1], index: 6, kind: input, shape index: {}]
  %s7 = inlined_call_operand.vmem [shape: bf16[5,25], index: 7, kind: input, shape index: {}]
  %s8 = inlined_call_operand.vmem [shape: f32[5,1], index: 8, kind: input, shape index: {}]
  %s9 = inlined_call_operand.vmem [shape: f32[1200,5], index: 9, kind: output, shape index: {}]
  %s10 = sld [smem:[#allocation0]]
  $region117: #{tpu_custom_call.1} parent=0
    _
  %s12 = ssub.s32 1, %s10
  %s13 = scalar_select 0, %s12, %s10
  $region1: #{tpu_custom_call.1} parent=0
    #allocation2 [shape = 'u8[524288]{0}', space=vmem, size = 0x80000, scoped, tag = 'output window, operand 0']
    loop: start=0, step=1, limit=5
    $region2: #{tpu_custom_call.1} parent=1 // loop_pre_header
      _
    $region3: #{tpu_custom_call.1} parent=1 // loop_header
      %s15 = sphi 0, %s19
      %p16 = scmp.ge.s32.totalorder %s15, 5
      %s25 = sphi 0, %s27
      %s28 = sphi 0, %s25
      %s29 = sphi 0, %s28
      %s45 = sphi 0, %s29
      %s49 = sphi 0, %s49
      %s51 = sphi 0, %s49
      %s52 = sphi 0, %s51
      %s66 = sphi 0, %s52
      %s70 = sphi 0, %s70
      %s72 = sphi 0, %s70
      %s73 = sphi 0, %s72
      %s87 = sphi 0, %s73
      %s91 = sphi 0, %s91
      %s93 = sphi 0, %s91
      %s94 = sphi 0, %s93
      %s108 = sphi 0, %s94
      %s112 = sphi 0, %s112
      %s114 = sphi 0, %s112
      %s115 = sphi 0, %s114
      %s129 = sphi 0, %s115
      %s133 = sphi 0, %s133
      %s135 = sphi 0, %s133
      %s136 = sphi 0, %s135
      %s150 = sphi 0, %s136
      %s154 = sphi 0, %s154
      %s156 = sphi 0, %s154
      %s157 = sphi 0, %s156
      %s171 = sphi 0, %s157
      %s175 = sphi 0, %s175
      %s177 = sphi 0, %s175
      %s178 = sphi 0, %s177
      %s192 = sphi 0, %s178
      %s196 = sphi 0, %s196
      %s198 = sphi 0, %s196
      %s199 = sphi 0, %s198
      %s213 = sphi 0, %s199
      %s219 = sphi 0, %s221
      %s222 = sphi 0, %s219
      %s223 = sphi 0, %s222
      %s239 = sphi 0, %s223
    $region4: #{tpu_custom_call.1} parent=1 // loop_header_branch
      %18 = sbr.rel (%p16) target = $region8
    $region5: #{tpu_custom_call.1} parent=1 // loop_body
      %s20 = ssub.s32 %s15, 1
      %s21 = ssub.s32 %s15, 2
      %s22 = sadd.s32 %s15, 1
      %s23 = ssub.s32 %s15, %s22
      %p24 = scmp.eq.s32.totalorder %s23, 0
      %s26 = sadd.s32 %s25, 1
      %s27 = scalar_select %p24, %s25, %s26
      %p30 = pneg %p24
      %p31 = scmp.eq.s32.totalorder %s15, 2
      %p32 = por %p30, %p31
      %p33 = scmp.ne.s32.totalorder %s25, %s28
      %p34 = scmp.eq.s32.totalorder %s15, 0
      %p35 = por %p33, %p34
      %p36 = scmp.ne.s32.totalorder %s25, %s28
      %p37 = scmp.eq.s32.totalorder %s20, 2
      %p38 = por %p36, %p37
      %p39 = scmp.ne.s32.totalorder %s28, %s29
      %p40 = scmp.eq.s32.totalorder %s20, 0
      %p41 = por %p39, %p40
      %p42 = scmp.ne.s32.totalorder %s28, %s29
      %p43 = scmp.eq.s32.totalorder %s21, 2
      %p44 = por %p42, %p43
      %p46 = scmp.ne.s32.totalorder %s29, %s45
      %p47 = scmp.eq.s32.totalorder %s21, 0
      %p48 = por %p46, %p47
      %s50 = sadd.s32 %s49, 1
      %p53 = scmp.eq.s32.totalorder %s15, 2
      %p54 = scmp.ne.s32.totalorder %s49, %s51
      %p55 = scmp.eq.s32.totalorder %s15, 0
      %p56 = por %p54, %p55
      %p57 = scmp.ne.s32.totalorder %s49, %s51
      %p58 = scmp.eq.s32.totalorder %s20, 2
      %p59 = por %p57, %p58
      %p60 = scmp.ne.s32.totalorder %s51, %s52
      %p61 = scmp.eq.s32.totalorder %s20, 0
      %p62 = por %p60, %p61
      %p63 = scmp.ne.s32.totalorder %s51, %s52
      %p64 = scmp.eq.s32.totalorder %s21, 2
      %p65 = por %p63, %p64
      %p67 = scmp.ne.s32.totalorder %s52, %s66
      %p68 = scmp.eq.s32.totalorder %s21, 0
      %p69 = por %p67, %p68
      %s71 = sadd.s32 %s70, 1
      %p74 = scmp.eq.s32.totalorder %s15, 2
      %p75 = scmp.ne.s32.totalorder %s70, %s72
      %p76 = scmp.eq.s32.totalorder %s15, 0
      %p77 = por %p75, %p76
      %p78 = scmp.ne.s32.totalorder %s70, %s72
      %p79 = scmp.eq.s32.totalorder %s20, 2
      %p80 = por %p78, %p79
      %p81 = scmp.ne.s32.totalorder %s72, %s73
      %p82 = scmp.eq.s32.totalorder %s20, 0
      %p83 = por %p81, %p82
      %p84 = scmp.ne.s32.totalorder %s72, %s73
      %p85 = scmp.eq.s32.totalorder %s21, 2
      %p86 = por %p84, %p85
      %p88 = scmp.ne.s32.totalorder %s73, %s87
      %p89 = scmp.eq.s32.totalorder %s21, 0
      %p90 = por %p88, %p89
      %s92 = sadd.s32 %s91, 1
      %p95 = scmp.eq.s32.totalorder %s15, 2
      %p96 = scmp.ne.s32.totalorder %s91, %s93
      %p97 = scmp.eq.s32.totalorder %s15, 0
      %p98 = por %p96, %p97
      %p99 = scmp.ne.s32.totalorder %s91, %s93
      %p100 = scmp.eq.s32.totalorder %s20, 2
      %p101 = por %p99, %p100
      %p102 = scmp.ne.s32.totalorder %s93, %s94
      %p103 = scmp.eq.s32.totalorder %s20, 0
      %p104 = por %p102, %p103
      %p105 = scmp.ne.s32.totalorder %s93, %s94
      %p106 = scmp.eq.s32.totalorder %s21, 2
      %p107 = por %p105, %p106
      %p109 = scmp.ne.s32.totalorder %s94, %s108
      %p110 = scmp.eq.s32.totalorder %s21, 0
      %p111 = por %p109, %p110
      %s113 = sadd.s32 %s112, 1
      %p116 = scmp.eq.s32.totalorder %s15, 2
      %p117 = scmp.ne.s32.totalorder %s112, %s114
      %p118 = scmp.eq.s32.totalorder %s15, 0
      %p119 = por %p117, %p118
      %p120 = scmp.ne.s32.totalorder %s112, %s114
      %p121 = scmp.eq.s32.totalorder %s20, 2
      %p122 = por %p120, %p121
      %p123 = scmp.ne.s32.totalorder %s114, %s115
      %p124 = scmp.eq.s32.totalorder %s20, 0
      %p125 = por %p123, %p124
      %p126 = scmp.ne.s32.totalorder %s114, %s115
      %p127 = scmp.eq.s32.totalorder %s21, 2
      %p128 = por %p126, %p127
      %p130 = scmp.ne.s32.totalorder %s115, %s129
      %p131 = scmp.eq.s32.totalorder %s21, 0
      %p132 = por %p130, %p131
      %s134 = sadd.s32 %s133, 1
      %p137 = scmp.eq.s32.totalorder %s15, 2
      %p138 = scmp.ne.s32.totalorder %s133, %s135
      %p139 = scmp.eq.s32.totalorder %s15, 0
      %p140 = por %p138, %p139
      %p141 = scmp.ne.s32.totalorder %s133, %s135
      %p142 = scmp.eq.s32.totalorder %s20, 2
      %p143 = por %p141, %p142
      %p144 = scmp.ne.s32.totalorder %s135, %s136
      %p145 = scmp.eq.s32.totalorder %s20, 0
      %p146 = por %p144, %p145
      %p147 = scmp.ne.s32.totalorder %s135, %s136
      %p148 = scmp.eq.s32.totalorder %s21, 2
      %p149 = por %p147, %p148
      %p151 = scmp.ne.s32.totalorder %s136, %s150
      %p152 = scmp.eq.s32.totalorder %s21, 0
      %p153 = por %p151, %p152
      %s155 = sadd.s32 %s154, 1
      %p158 = scmp.eq.s32.totalorder %s15, 2
      %p159 = scmp.ne.s32.totalorder %s154, %s156
      %p160 = scmp.eq.s32.totalorder %s15, 0
      %p161 = por %p159, %p160
      %p162 = scmp.ne.s32.totalorder %s154, %s156
      %p163 = scmp.eq.s32.totalorder %s20, 2
      %p164 = por %p162, %p163
      %p165 = scmp.ne.s32.totalorder %s156, %s157
      %p166 = scmp.eq.s32.totalorder %s20, 0
      %p167 = por %p165, %p166
      %p168 = scmp.ne.s32.totalorder %s156, %s157
      %p169 = scmp.eq.s32.totalorder %s21, 2
      %p170 = por %p168, %p169
      %p172 = scmp.ne.s32.totalorder %s157, %s171
      %p173 = scmp.eq.s32.totalorder %s21, 0
      %p174 = por %p172, %p173
      %s176 = sadd.s32 %s175, 1
      %p179 = scmp.eq.s32.totalorder %s15, 2
      %p180 = scmp.ne.s32.totalorder %s175, %s177
      %p181 = scmp.eq.s32.totalorder %s15, 0
      %p182 = por %p180, %p181
      %p183 = scmp.ne.s32.totalorder %s175, %s177
      %p184 = scmp.eq.s32.totalorder %s20, 2
      %p185 = por %p183, %p184
      %p186 = scmp.ne.s32.totalorder %s177, %s178
      %p187 = scmp.eq.s32.totalorder %s20, 0
      %p188 = por %p186, %p187
      %p189 = scmp.ne.s32.totalorder %s177, %s178
      %p190 = scmp.eq.s32.totalorder %s21, 2
      %p191 = por %p189, %p190
      %p193 = scmp.ne.s32.totalorder %s178, %s192
      %p194 = scmp.eq.s32.totalorder %s21, 0
      %p195 = por %p193, %p194
      %s197 = sadd.s32 %s196, 1
      %p200 = scmp.eq.s32.totalorder %s15, 2
      %p201 = scmp.ne.s32.totalorder %s196, %s198
      %p202 = scmp.eq.s32.totalorder %s15, 0
      %p203 = por %p201, %p202
      %p204 = scmp.ne.s32.totalorder %s196, %s198
      %p205 = scmp.eq.s32.totalorder %s20, 2
      %p206 = por %p204, %p205
      %p207 = scmp.ne.s32.totalorder %s198, %s199
      %p208 = scmp.eq.s32.totalorder %s20, 0
      %p209 = por %p207, %p208
      %p210 = scmp.ne.s32.totalorder %s198, %s199
      %p211 = scmp.eq.s32.totalorder %s21, 2
      %p212 = por %p210, %p211
      %p214 = scmp.ne.s32.totalorder %s199, %s213
      %p215 = scmp.eq.s32.totalorder %s21, 0
      %p216 = por %p214, %p215
      %s217 = ssub.s32 %s15, %s22
      %p218 = scmp.eq.s32.totalorder %s217, 0
      %s220 = sadd.s32 %s219, 1
      %s221 = scalar_select %p218, %s219, %s220
      %p224 = pneg %p218
      %p225 = scmp.eq.s32.totalorder %s15, 2
      %p226 = por %p224, %p225
      %p227 = scmp.ne.s32.totalorder %s219, %s222
      %p228 = scmp.eq.s32.totalorder %s15, 0
      %p229 = por %p227, %p228
      %p230 = scmp.ne.s32.totalorder %s219, %s222
      %p231 = scmp.eq.s32.totalorder %s20, 2
      %p232 = por %p230, %p231
      %p233 = scmp.ne.s32.totalorder %s222, %s223
      %p234 = scmp.eq.s32.totalorder %s20, 0
      %p235 = por %p233, %p234
      %p236 = scmp.ne.s32.totalorder %s222, %s223
      %p237 = scmp.eq.s32.totalorder %s21, 2
      %p238 = por %p236, %p237
      %p240 = scmp.ne.s32.totalorder %s223, %s239
      %p241 = scmp.eq.s32.totalorder %s21, 0
      %p242 = por %p240, %p241
      %p243 = scmp.le.s32.totalorder 1, %s15
      %p244 = scmp.lt.s32.totalorder %s15, 4
      %p245 = pnand %p243, %p244
      %p246 = pneg %p245
      // Predicated region
      $region9: #{tpu_custom_call.1} parent=5 // pred_check
        _
      $region10: #{tpu_custom_call.1} parent=5 // pred_check_branch
        %248 = sbr.rel (%p245) target = $region12
      $region11: #{tpu_custom_call.1} parent=5 // pred_region
        %s249 = ssub.s32 %s15, 1
        // Predicated region
        $region13: #{tpu_custom_call.1} parent=11 // pred_check
          %p250 = pneg %p62
        $region14: #{tpu_custom_call.1} parent=11 // pred_check_branch
          %252 = sbr.rel (%p250) target = $region16
        $region15: #{tpu_custom_call.1} parent=11 // pred_region
          _
        $region16: #{tpu_custom_call.1} parent=11 // pred_fallthru
          _
        // Predicated region
        $region17: #{tpu_custom_call.1} parent=11 // pred_check
          %p253 = pneg %p83
        $region18: #{tpu_custom_call.1} parent=11 // pred_check_branch
          %255 = sbr.rel (%p253) target = $region20
        $region19: #{tpu_custom_call.1} parent=11 // pred_region
          _
        $region20: #{tpu_custom_call.1} parent=11 // pred_fallthru
          _
        // Predicated region
        $region21: #{tpu_custom_call.1} parent=11 // pred_check
          %p256 = pneg %p104
        $region22: #{tpu_custom_call.1} parent=11 // pred_check_branch
          %258 = sbr.rel (%p256) target = $region24
        $region23: #{tpu_custom_call.1} parent=11 // pred_region
          _
        $region24: #{tpu_custom_call.1} parent=11 // pred_fallthru
          _
        // Predicated region
        $region25: #{tpu_custom_call.1} parent=11 // pred_check
          %p259 = pneg %p125
        $region26: #{tpu_custom_call.1} parent=11 // pred_check_branch
          %261 = sbr.rel (%p259) target = $region28
        $region27: #{tpu_custom_call.1} parent=11 // pred_region
          _
        $region28: #{tpu_custom_call.1} parent=11 // pred_fallthru
          _
        // Predicated region
        $region29: #{tpu_custom_call.1} parent=11 // pred_check
          %p262 = pneg %p146
        $region30: #{tpu_custom_call.1} parent=11 // pred_check_branch
          %264 = sbr.rel (%p262) target = $region32
        $region31: #{tpu_custom_call.1} parent=11 // pred_region
          _
        $region32: #{tpu_custom_call.1} parent=11 // pred_fallthru
          _
        // Predicated region
        $region33: #{tpu_custom_call.1} parent=11 // pred_check
          %p265 = pneg %p167
        $region34: #{tpu_custom_call.1} parent=11 // pred_check_branch
          %267 = sbr.rel (%p265) target = $region36
        $region35: #{tpu_custom_call.1} parent=11 // pred_region
          _
        $region36: #{tpu_custom_call.1} parent=11 // pred_fallthru
          _
        // Predicated region
        $region37: #{tpu_custom_call.1} parent=11 // pred_check
          %p268 = pneg %p188
        $region38: #{tpu_custom_call.1} parent=11 // pred_check_branch
          %270 = sbr.rel (%p268) target = $region40
        $region39: #{tpu_custom_call.1} parent=11 // pred_region
          _
        $region40: #{tpu_custom_call.1} parent=11 // pred_fallthru
          _
        // Predicated region
        $region41: #{tpu_custom_call.1} parent=11 // pred_check
          %p271 = pneg %p209
        $region42: #{tpu_custom_call.1} parent=11 // pred_check_branch
          %273 = sbr.rel (%p271) target = $region44
        $region43: #{tpu_custom_call.1} parent=11 // pred_region
          _
        $region44: #{tpu_custom_call.1} parent=11 // pred_fallthru
          _
      $region12: #{tpu_custom_call.1} parent=5 // pred_fallthru
        _
      %p274 = scmp.lt.s32.totalorder %s15, 3
      // Predicated region
      $region45: #{tpu_custom_call.1} parent=5 // pred_check
        %p275 = pneg %p274
      $region46: #{tpu_custom_call.1} parent=5 // pred_check_branch
        %277 = sbr.rel (%p275) target = $region48
      $region47: #{tpu_custom_call.1} parent=5 // pred_region
        // Predicated region
        $region49: #{tpu_custom_call.1} parent=47 // pred_check
          %p278 = pneg %p35
        $region50: #{tpu_custom_call.1} parent=47 // pred_check_branch
          %280 = sbr.rel (%p278) target = $region52
        $region51: #{tpu_custom_call.1} parent=47 // pred_region
          %s281 = smul.u32 64, %s15
          %s282 = ssub.s32 150, %s281
          %p283 = scmp.lt.s32.totalorder %s282, 64
          %s284 = scalar_select %p283, %s282, 64
          %s285 = smul.u32 128, %s284
          %p286 = scmp.lt.s32.totalorder %s281, 149
          %s287 = scalar_select %p286, %s281, 149
          %s288 = smul.addr %s287, 8
          %s289 = scalar_lea.vmem %s0, %s288
          %s290 = smul.u32 64, %s15
          %s291 = ssub.s32 150, %s290
          %p292 = scmp.lt.s32.totalorder %s291, 64
          %s293 = scalar_select %p292, %s291, 64
          %s294 = smul.u32 128, %s293
        $region52: #{tpu_custom_call.1} parent=47 // pred_fallthru
          _
      $region48: #{tpu_custom_call.1} parent=5 // pred_fallthru
        _
      %p295 = scmp.le.s32.totalorder 1, %s15
      %p296 = scmp.lt.s32.totalorder %s15, 4
      %p297 = pnand %p295, %p296
      %p298 = pneg %p297
      // Predicated region
      $region53: #{tpu_custom_call.1} parent=5 // pred_check
        _
      $region54: #{tpu_custom_call.1} parent=5 // pred_check_branch
        %300 = sbr.rel (%p297) target = $region56
      $region55: #{tpu_custom_call.1} parent=5 // pred_region
        %s301 = ssub.s32 %s15, 1
        %s302 = smul.u32 64, %s20
        %s303 = ssub.s32 150, %s302
        %p304 = scmp.lt.s32.totalorder %s303, 64
        %s305 = scalar_select %p304, %s303, 64
        %s306 = smul.u32 128, %s305
        %p307 = scmp.lt.s32.totalorder %s302, 149
        %s308 = scalar_select %p307, %s302, 149
        %s309 = smul.addr %s308, 8
        %s310 = scalar_lea.vmem %s0, %s309
        %p311 = pneg %p41
        %p312 = pneg %p38
        %p313 = pneg %p62
        %p314 = pneg %p59
        %p315 = pneg %p83
        %p316 = pneg %p80
        %p317 = pneg %p104
        %p318 = pneg %p101
        %p319 = pneg %p125
        %p320 = pneg %p122
        %p321 = pneg %p146
        %p322 = pneg %p143
        %p323 = pneg %p167
        %p324 = pneg %p164
        %p325 = pneg %p188
        %p326 = pneg %p185
        %p327 = pneg %p209
        %p328 = pneg %p206
        %p329 = pneg %p235
        %p330 = pneg %p232
        %s331 = sand.u32 %s222, 1
        %s332 = sand.u32 %s222, 1
        %s333 = smul.addr %s332, 512
        %s334 = scalar_lea.vmem [#allocation2], %s333
        %s335 = smul.u32 64, %s20
        %s336 = ssub.s32 150, %s335
        %p337 = scmp.lt.s32.totalorder %s336, 64
        %s338 = scalar_select %p337, %s336, 64
        %s339 = smul.u32 128, %s338
        %p340 = scmp.lt.s32.totalorder %s335, 149
        %s341 = scalar_select %p340, %s335, 149
        %s342 = smul.addr %s341, 8
        %s343 = scalar_lea.vmem %s0, %s342
        %s344 = smul.u32 64, %s20
        %s345 = ssub.s32 150, %s344
        %p346 = scmp.lt.s32.totalorder %s345, 64
        %s347 = scalar_select %p346, %s345, 64
        %s348 = smul.u32 128, %s347
        %s349 = smul.u32 64, %s20
        %s350 = ssub.s32 150, %s349
        %p351 = scmp.lt.s32.totalorder %s350, 64
        %s352 = scalar_select %p351, %s350, 64
        %s353 = smul.u32 128, %s352
        %v355 = vld [vmem:[%s343] sm:$0xff]
        %v356 = vld [vmem:[%s343 + $0x8] sm:$0xff]
        %v357 = vld [vmem:[%s343 + $0x10] sm:$0xff]
        %v358 = vld [vmem:[%s343 + $0x18] sm:$0xff]
        %v359 = vld [vmem:[%s343 + $0x20] sm:$0xff]
        %v360 = vld [vmem:[%s343 + $0x28] sm:$0xff]
        %v361 = vld [vmem:[%s343 + $0x30] sm:$0xff]
        %v362 = vld [vmem:[%s343 + $0x38] sm:$0xff]
        %v363 = vld [vmem:[%s343 + $0x40] sm:$0xff]
        %v364 = vld [vmem:[%s343 + $0x48] sm:$0xff]
        %v365 = vld [vmem:[%s343 + $0x50] sm:$0xff]
        %v366 = vld [vmem:[%s343 + $0x58] sm:$0xff]
        %v367 = vld [vmem:[%s343 + $0x60] sm:$0xff]
        %v368 = vld [vmem:[%s343 + $0x68] sm:$0xff]
        %v369 = vld [vmem:[%s343 + $0x70] sm:$0xff]
        %v370 = vld [vmem:[%s343 + $0x78] sm:$0xff]
        %v371 = vld [vmem:[%s343 + $0x80] sm:$0xff]
        %v372 = vld [vmem:[%s343 + $0x88] sm:$0xff]
        %v373 = vld [vmem:[%s343 + $0x90] sm:$0xff]
        %v374 = vld [vmem:[%s343 + $0x98] sm:$0xff]
        %v375 = vld [vmem:[%s343 + $0xa0] sm:$0xff]
        %v376 = vld [vmem:[%s343 + $0xa8] sm:$0xff]
        %v377 = vld [vmem:[%s343 + $0xb0] sm:$0xff]
        %v378 = vld [vmem:[%s343 + $0xb8] sm:$0xff]
        %v379 = vld [vmem:[%s343 + $0xc0] sm:$0xff]
        %v380 = vld [vmem:[%s343 + $0xc8] sm:$0xff]
        %v381 = vld [vmem:[%s343 + $0xd0] sm:$0xff]
        %v382 = vld [vmem:[%s343 + $0xd8] sm:$0xff]
        %v383 = vld [vmem:[%s343 + $0xe0] sm:$0xff]
        %v384 = vld [vmem:[%s343 + $0xe8] sm:$0xff]
        %v385 = vld [vmem:[%s343 + $0xf0] sm:$0xff]
        %v386 = vld [vmem:[%s343 + $0xf8] sm:$0xff]
        %v387 = vld [vmem:[%s343 + $0x100] sm:$0xff]
        %v388 = vld [vmem:[%s343 + $0x108] sm:$0xff]
        %v389 = vld [vmem:[%s343 + $0x110] sm:$0xff]
        %v390 = vld [vmem:[%s343 + $0x118] sm:$0xff]
        %v391 = vld [vmem:[%s343 + $0x120] sm:$0xff]
        %v392 = vld [vmem:[%s343 + $0x128] sm:$0xff]
        %v393 = vld [vmem:[%s343 + $0x130] sm:$0xff]
        %v394 = vld [vmem:[%s343 + $0x138] sm:$0xff]
        %v395 = vld [vmem:[%s343 + $0x140] sm:$0xff]
        %v396 = vld [vmem:[%s343 + $0x148] sm:$0xff]
        %v397 = vld [vmem:[%s343 + $0x150] sm:$0xff]
        %v398 = vld [vmem:[%s343 + $0x158] sm:$0xff]
        %v399 = vld [vmem:[%s343 + $0x160] sm:$0xff]
        %v400 = vld [vmem:[%s343 + $0x168] sm:$0xff]
        %v401 = vld [vmem:[%s343 + $0x170] sm:$0xff]
        %v402 = vld [vmem:[%s343 + $0x178] sm:$0xff]
        %v403 = vld [vmem:[%s343 + $0x180] sm:$0xff]
        %v404 = vld [vmem:[%s343 + $0x188] sm:$0xff]
        %v405 = vld [vmem:[%s343 + $0x190] sm:$0xff]
        %v406 = vld [vmem:[%s343 + $0x198] sm:$0xff]
        %v407 = vld [vmem:[%s343 + $0x1a0] sm:$0xff]
        %v408 = vld [vmem:[%s343 + $0x1a8] sm:$0xff]
        %v409 = vld [vmem:[%s343 + $0x1b0] sm:$0xff]
        %v410 = vld [vmem:[%s343 + $0x1b8] sm:$0xff]
        %v411 = vld [vmem:[%s343 + $0x1c0] sm:$0xff]
        %v412 = vld [vmem:[%s343 + $0x1c8] sm:$0xff]
        %v413 = vld [vmem:[%s343 + $0x1d0] sm:$0xff]
        %v414 = vld [vmem:[%s343 + $0x1d8] sm:$0xff]
        %v415 = vld [vmem:[%s343 + $0x1e0] sm:$0xff]
        %v416 = vld [vmem:[%s343 + $0x1e8] sm:$0xff]
        %v417 = vld [vmem:[%s343 + $0x1f0] sm:$0xff]
        %v418 = vld [vmem:[%s343 + $0x1f8] sm:$0xff]
        %v419 = vpack.c.bf16 %v356, %v355
        %v420 = vpack.c.bf16 %v358, %v357
        %v421 = vpack.c.bf16 %v360, %v359
        %v422 = vpack.c.bf16 %v362, %v361
        %v423 = vpack.c.bf16 %v364, %v363
        %v424 = vpack.c.bf16 %v366, %v365
        %v425 = vpack.c.bf16 %v368, %v367
        %v426 = vpack.c.bf16 %v370, %v369
        %v427 = vpack.c.bf16 %v372, %v371
        %v428 = vpack.c.bf16 %v374, %v373
        %v429 = vpack.c.bf16 %v376, %v375
        %v430 = vpack.c.bf16 %v378, %v377
        %v431 = vpack.c.bf16 %v380, %v379
        %v432 = vpack.c.bf16 %v382, %v381
        %v433 = vpack.c.bf16 %v384, %v383
        %v434 = vpack.c.bf16 %v386, %v385
        %v435 = vpack.c.bf16 %v388, %v387
        %v436 = vpack.c.bf16 %v390, %v389
        %v437 = vpack.c.bf16 %v392, %v391
        %v438 = vpack.c.bf16 %v394, %v393
        %v439 = vpack.c.bf16 %v396, %v395
        %v440 = vpack.c.bf16 %v398, %v397
        %v441 = vpack.c.bf16 %v400, %v399
        %v442 = vpack.c.bf16 %v402, %v401
        %v443 = vpack.c.bf16 %v404, %v403
        %v444 = vpack.c.bf16 %v406, %v405
        %v445 = vpack.c.bf16 %v408, %v407
        %v446 = vpack.c.bf16 %v410, %v409
        %v447 = vpack.c.bf16 %v412, %v411
        %v448 = vpack.c.bf16 %v414, %v413
        %v449 = vpack.c.bf16 %v416, %v415
        %v450 = vpack.c.bf16 %v418, %v417
        %v451 = vld [vmem:[%s1] sm:$0xf]
        %v452 = vld [vmem:[%s1 + $0x4] sm:$0xf]
        %v453 = vld [vmem:[%s1 + $0x8] sm:$0xf]
        %v454 = vld [vmem:[%s1 + $0xc] sm:$0x1]
        %v455 = vld [vmem:[%s2] sm:$0xff]
        %v456 = vld [vmem:[%s2 + $0x8] sm:$0xff]
        %v457 = vld [vmem:[%s2 + $0x10] sm:$0xff]
        %v458 = vld [vmem:[%s2 + $0x18] sm:$0x1]
        %460 = vset.pattern.permute.xlu0 0
        %461 = vperm.xlu0 %460, %v455
        %v462 = vpop.permute.xlu0 %461
        %465 = vset.pattern.permute.xlu0 0
        %466 = vperm.xlu0 %465, %v456
        %v467 = vpop.permute.xlu0 %466
        %470 = vset.pattern.permute.xlu0 0
        %471 = vperm.xlu0 %470, %v457
        %v472 = vpop.permute.xlu0 %471
        %475 = vset.pattern.permute.xlu0 0
        %476 = vperm.xlu0 %475, %v458
        %v477 = vpop.permute.xlu0 %476
        %v483 = vunpack.c.l.b16 %v451
        %v484 = vunpack.c.l.b16 %v452
        %v485 = vunpack.c.l.b16 %v453
        %v486 = vunpack.c.l.b16 %v454
        %v487 = vpack.c.b16 %v484, %v483
        %v488 = vpack.c.b16 %v486, %v485
        %vm489 = vcmask 39936
        %v491 = vsel %vm489, %v487, 0
        %v494 = vsel %vm489, %v488, 0
        %v497 = vsel %vm489, %v419, 0
        %v500 = vsel %vm489, %v420, 0
        %v503 = vsel %vm489, %v421, 0
        %v506 = vsel %vm489, %v422, 0
        %v509 = vsel %vm489, %v423, 0
        %v512 = vsel %vm489, %v424, 0
        %v515 = vsel %vm489, %v425, 0
        %v518 = vsel %vm489, %v426, 0
        %v521 = vsel %vm489, %v427, 0
        %v524 = vsel %vm489, %v428, 0
        %v527 = vsel %vm489, %v429, 0
        %v530 = vsel %vm489, %v430, 0
        %v533 = vsel %vm489, %v431, 0
        %v536 = vsel %vm489, %v432, 0
        %v539 = vsel %vm489, %v433, 0
        %v542 = vsel %vm489, %v434, 0
        %v545 = vsel %vm489, %v435, 0
        %v548 = vsel %vm489, %v436, 0
        %v551 = vsel %vm489, %v437, 0
        %v554 = vsel %vm489, %v438, 0
        %v557 = vsel %vm489, %v439, 0
        %v560 = vsel %vm489, %v440, 0
        %v563 = vsel %vm489, %v441, 0
        %v566 = vsel %vm489, %v442, 0
        %v569 = vsel %vm489, %v443, 0
        %v572 = vsel %vm489, %v444, 0
        %v575 = vsel %vm489, %v445, 0
        %v578 = vsel %vm489, %v446, 0
        %v581 = vsel %vm489, %v447, 0
        %v584 = vsel %vm489, %v448, 0
        %v587 = vsel %vm489, %v449, 0
        %v590 = vsel %vm489, %v450, 0
        %592 = vmatprep.subr.bf16.mxu0 0
        %593 = vmatpush1.bf16.xpose.msra.mxu0 %v518
        %594 = vmatprep.subr.bf16.mxu0 0
        %595 = vmatpush1.bf16.xpose.msra.mxu0 %v515
        %596 = vmatprep.subr.bf16.mxu0 0
        %597 = vmatpush1.bf16.xpose.msra.mxu0 %v512
        %598 = vmatprep.subr.bf16.mxu0 0
        %599 = vmatpush1.bf16.xpose.msra.mxu0 %v509
        %600 = vmatprep.subr.bf16.mxu0 0
        %601 = vmatpush1.bf16.xpose.msra.mxu0 %v506
        %602 = vmatprep.subr.bf16.mxu0 0
        %603 = vmatpush1.bf16.xpose.msra.mxu0 %v503
        %604 = vmatprep.subr.bf16.mxu0 0
        %605 = vmatpush1.bf16.xpose.msra.mxu0 %v500
        %606 = vmatprep.subr.bf16.mxu0 0
        %607 = vmatpush1.bf16.xpose.msra.mxu0 %v497
        %608 = vmatprep.subr.bf16.mxu0 0
        %609 = vmatpush2.bf16.xpose.msra.mxu0 %v542
        %610 = vmatprep.subr.bf16.mxu0 0
        %611 = vmatpush2.bf16.xpose.msra.mxu0 %v539
        %612 = vmatprep.subr.bf16.mxu0 0
        %613 = vmatpush2.bf16.xpose.msra.mxu0 %v536
        %614 = vmatprep.subr.bf16.mxu0 0
        %615 = vmatpush2.bf16.xpose.msra.mxu0 %v533
        %616 = vmatprep.subr.bf16.mxu0 0
        %617 = vmatpush2.bf16.xpose.msra.mxu0 %v530
        %618 = vmatprep.subr.bf16.mxu0 0
        %619 = vmatpush2.bf16.xpose.msra.mxu0 %v527
        %620 = vmatprep.subr.bf16.mxu0 0
        %621 = vmatpush2.bf16.xpose.msra.mxu0 %v524
        %622 = vmatprep.subr.bf16.mxu0 0
        %623 = vmatpush2.bf16.xpose.msra.mxu0 %v521
        %624 = vmatprep.mubr.bf16.mxu0 0
        %625 = vmatmul.mubr.bf16.gmra.mxu0 %v491
        %v626 = vpop.f32.mrf.mxu0
        %v627 = vadd.f32 %v462, %v626
        %v628 = vpop.f32.mrf.mxu0
        %v629 = vadd.f32 %v462, %v628
        %v630 = vpop.f32.mrf.mxu0
        %v631 = vadd.f32 %v467, %v630
        %v632 = vpop.f32.mrf.mxu0
        %v633 = vadd.f32 %v467, %v632
        %634 = vmatprep.mubr.bf16.mxu0 0
        %635 = vmatmul.mubr.bf16.gmra.mxu0 %v494
        %v636 = vpop.f32.mrf.mxu0
        %v637 = vadd.f32 %v472, %v636
        %v638 = vpop.f32.mrf.mxu0
        %v639 = vadd.f32 %v472, %v638
        %v640 = vpop.f32.mrf.mxu0
        %v641 = vadd.f32 %v477, %v640
        %v642 = vpop.f32.mrf.mxu0
        %v643 = vadd.f32 %v477, %v642
        %644 = vdwg.mxu0
        %645 = vmatprep.subr.bf16.mxu0 0
        %646 = vmatpush1.bf16.xpose.msra.mxu0 %v566
        %647 = vmatprep.subr.bf16.mxu0 0
        %648 = vmatpush1.bf16.xpose.msra.mxu0 %v563
        %649 = vmatprep.subr.bf16.mxu0 0
        %650 = vmatpush1.bf16.xpose.msra.mxu0 %v560
        %651 = vmatprep.subr.bf16.mxu0 0
        %652 = vmatpush1.bf16.xpose.msra.mxu0 %v557
        %653 = vmatprep.subr.bf16.mxu0 0
        %654 = vmatpush1.bf16.xpose.msra.mxu0 %v554
        %655 = vmatprep.subr.bf16.mxu0 0
        %656 = vmatpush1.bf16.xpose.msra.mxu0 %v551
        %657 = vmatprep.subr.bf16.mxu0 0
        %658 = vmatpush1.bf16.xpose.msra.mxu0 %v548
        %659 = vmatprep.subr.bf16.mxu0 0
        %660 = vmatpush1.bf16.xpose.msra.mxu0 %v545
        %661 = vmatprep.subr.bf16.mxu0 0
        %662 = vmatpush2.bf16.xpose.msra.mxu0 %v590
        %663 = vmatprep.subr.bf16.mxu0 0
        %664 = vmatpush2.bf16.xpose.msra.mxu0 %v587
        %665 = vmatprep.subr.bf16.mxu0 0
        %666 = vmatpush2.bf16.xpose.msra.mxu0 %v584
        %667 = vmatprep.subr.bf16.mxu0 0
        %668 = vmatpush2.bf16.xpose.msra.mxu0 %v581
        %669 = vmatprep.subr.bf16.mxu0 0
        %670 = vmatpush2.bf16.xpose.msra.mxu0 %v578
        %671 = vmatprep.subr.bf16.mxu0 0
        %672 = vmatpush2.bf16.xpose.msra.mxu0 %v575
        %673 = vmatprep.subr.bf16.mxu0 0
        %674 = vmatpush2.bf16.xpose.msra.mxu0 %v572
        %675 = vmatprep.subr.bf16.mxu0 0
        %676 = vmatpush2.bf16.xpose.msra.mxu0 %v569
        %677 = vmatprep.mubr.bf16.mxu0 0
        %678 = vmatmul.mubr.bf16.gmra.mxu0 %v491
        %v679 = vpop.f32.mrf.mxu0
        %v680 = vadd.f32 %v462, %v679
        %v681 = vpop.f32.mrf.mxu0
        %v682 = vadd.f32 %v462, %v681
        %v683 = vpop.f32.mrf.mxu0
        %v684 = vadd.f32 %v467, %v683
        %v685 = vpop.f32.mrf.mxu0
        %v686 = vadd.f32 %v467, %v685
        %687 = vmatprep.mubr.bf16.mxu0 0
        %688 = vmatmul.mubr.bf16.gmra.mxu0 %v494
        %v689 = vpop.f32.mrf.mxu0
        %v690 = vadd.f32 %v472, %v689
        %v691 = vpop.f32.mrf.mxu0
        %v692 = vadd.f32 %v472, %v691
        %v693 = vpop.f32.mrf.mxu0
        %v694 = vadd.f32 %v477, %v693
        %v695 = vpop.f32.mrf.mxu0
        %v696 = vadd.f32 %v477, %v695
        %697 = vdwg.mxu0
        %v698 = vtanh.pop %v627
        %v699 = vtanh.pop %v629
        %v700 = vtanh.pop %v680
        %v701 = vtanh.pop %v682
        %v702 = vtanh.pop %v631
        %v703 = vtanh.pop %v633
        %v704 = vtanh.pop %v684
        %v705 = vtanh.pop %v686
        %v706 = vtanh.pop %v637
        %v707 = vtanh.pop %v639
        %v708 = vtanh.pop %v690
        %v709 = vtanh.pop %v692
        %v710 = vtanh.pop %v641
        %v711 = vtanh.pop %v643
        %v712 = vtanh.pop %v694
        %v713 = vtanh.pop %v696
        %v714 = vld [vmem:[%s3] sm:$0xf]
        %v715 = vld [vmem:[%s3 + $0x4] sm:$0xf]
        %v716 = vld [vmem:[%s3 + $0x8] sm:$0xf]
        %v717 = vld [vmem:[%s3 + $0xc] sm:$0x1]
        %v718 = vpack.c.bf16 %v702, %v698
        %v719 = vpack.c.bf16 %v703, %v699
        %v720 = vpack.c.bf16 %v704, %v700
        %v721 = vpack.c.bf16 %v705, %v701
        %v722 = vpack.c.bf16 %v710, %v706
        %v723 = vpack.c.bf16 %v711, %v707
        %v724 = vpack.c.bf16 %v712, %v708
        %v725 = vpack.c.bf16 %v713, %v709
        %v726 = vld [vmem:[%s4] sm:$0xff]
        %v727 = vld [vmem:[%s4 + $0x8] sm:$0xff]
        %v728 = vld [vmem:[%s4 + $0x10] sm:$0xff]
        %v729 = vld [vmem:[%s4 + $0x18] sm:$0x1]
        %731 = vset.pattern.permute.xlu0 0
        %732 = vperm.xlu0 %731, %v726
        %v733 = vpop.permute.xlu0 %732
        %736 = vset.pattern.permute.xlu0 0
        %737 = vperm.xlu0 %736, %v727
        %v738 = vpop.permute.xlu0 %737
        %741 = vset.pattern.permute.xlu0 0
        %742 = vperm.xlu0 %741, %v728
        %v743 = vpop.permute.xlu0 %742
        %746 = vset.pattern.permute.xlu0 0
        %747 = vperm.xlu0 %746, %v729
        %v748 = vpop.permute.xlu0 %747
        %v754 = vunpack.c.l.b16 %v714
        %v755 = vunpack.c.l.b16 %v715
        %v756 = vunpack.c.l.b16 %v716
        %v757 = vunpack.c.l.b16 %v717
        %v758 = vpack.c.b16 %v755, %v754
        %v759 = vpack.c.b16 %v757, %v756
        %vm760 = vcmask 203776
        %v762 = vsel %vm760, %v758, 0
        %v765 = vsel %vm760, %v759, 0
        %vm767 = vcmask 1043456
        %vm768 = vcmask 1044480
        %v769 = vsel %vm767, 4294967295, 65535
        %v770 = vsel %vm768, %v769, 0
        %v772 = vand.u32 %v722, %v770
        %v775 = vand.u32 %v723, %v770
        %v778 = vand.u32 %v724, %v770
        %v781 = vand.u32 %v725, %v770
        %783 = vmatprep.subr.bf16.mxu0 0
        %784 = vmatpush1.bf16.msra.mxu0 0
        %785 = vmatprep.subr.bf16.mxu0 0
        %786 = vmatpush1.bf16.msra.mxu0 0
        %787 = vmatprep.subr.bf16.mxu0 0
        %788 = vmatpush1.bf16.msra.mxu0 0
        %789 = vmatprep.subr.bf16.mxu0 0
        %790 = vmatpush1.bf16.msra.mxu0 0
        %791 = vmatprep.subr.bf16.mxu0 0
        %792 = vmatpush1.bf16.msra.mxu0 0
        %793 = vmatprep.subr.bf16.mxu0 0
        %794 = vmatpush1.bf16.msra.mxu0 0
        %795 = vmatprep.subr.bf16.mxu0 %v775
        %796 = vmatpush1.bf16.msra.mxu0 %v772
        %797 = vmatprep.subr.bf16.mxu0 %v719
        %798 = vmatpush1.bf16.msra.mxu0 %v718
        %799 = vmatprep.subr.bf16.mxu0 0
        %800 = vmatpush2.bf16.msra.mxu0 0
        %801 = vmatprep.subr.bf16.mxu0 0
        %802 = vmatpush2.bf16.msra.mxu0 0
        %803 = vmatprep.subr.bf16.mxu0 0
        %804 = vmatpush2.bf16.msra.mxu0 0
        %805 = vmatprep.subr.bf16.mxu0 0
        %806 = vmatpush2.bf16.msra.mxu0 0
        %807 = vmatprep.subr.bf16.mxu0 0
        %808 = vmatpush2.bf16.msra.mxu0 0
        %809 = vmatprep.subr.bf16.mxu0 0
        %810 = vmatpush2.bf16.msra.mxu0 0
        %811 = vmatprep.subr.bf16.mxu0 0
        %812 = vmatpush2.bf16.msra.mxu0 0
        %813 = vmatprep.subr.bf16.mxu0 0
        %814 = vmatpush2.bf16.msra.mxu0 0
        %815 = vmatprep.mubr.bf16.mxu0 0
        %816 = vmatmul.mubr.bf16.gmra.mxu0 %v762
        %v817 = vpop.f32.mrf.mxu0
        %v818 = vadd.f32 %v733, %v817
        %v819 = vpop.f32.mrf.mxu0
        %v820 = vadd.f32 %v733, %v819
        %v821 = vpop.f32.mrf.mxu0
        %v822 = vadd.f32 %v738, %v821
        %v823 = vpop.f32.mrf.mxu0
        %v824 = vadd.f32 %v738, %v823
        %825 = vmatprep.mubr.bf16.mxu0 0
        %826 = vmatmul.mubr.bf16.gmra.mxu0 %v765
        %v827 = vpop.f32.mrf.mxu0
        %v828 = vadd.f32 %v743, %v827
        %v829 = vpop.f32.mrf.mxu0
        %v830 = vadd.f32 %v743, %v829
        %v831 = vpop.f32.mrf.mxu0
        %v832 = vadd.f32 %v748, %v831
        %v833 = vpop.f32.mrf.mxu0
        %v834 = vadd.f32 %v748, %v833
        %835 = vdwg.mxu0
        %836 = vmatprep.subr.bf16.mxu0 0
        %837 = vmatpush1.bf16.msra.mxu0 0
        %838 = vmatprep.subr.bf16.mxu0 0
        %839 = vmatpush1.bf16.msra.mxu0 0
        %840 = vmatprep.subr.bf16.mxu0 0
        %841 = vmatpush1.bf16.msra.mxu0 0
        %842 = vmatprep.subr.bf16.mxu0 0
        %843 = vmatpush1.bf16.msra.mxu0 0
        %844 = vmatprep.subr.bf16.mxu0 0
        %845 = vmatpush1.bf16.msra.mxu0 0
        %846 = vmatprep.subr.bf16.mxu0 0
        %847 = vmatpush1.bf16.msra.mxu0 0
        %848 = vmatprep.subr.bf16.mxu0 %v781
        %849 = vmatpush1.bf16.msra.mxu0 %v778
        %850 = vmatprep.subr.bf16.mxu0 %v721
        %851 = vmatpush1.bf16.msra.mxu0 %v720
        %852 = vmatprep.subr.bf16.mxu0 0
        %853 = vmatpush2.bf16.msra.mxu0 0
        %854 = vmatprep.subr.bf16.mxu0 0
        %855 = vmatpush2.bf16.msra.mxu0 0
        %856 = vmatprep.subr.bf16.mxu0 0
        %857 = vmatpush2.bf16.msra.mxu0 0
        %858 = vmatprep.subr.bf16.mxu0 0
        %859 = vmatpush2.bf16.msra.mxu0 0
        %860 = vmatprep.subr.bf16.mxu0 0
        %861 = vmatpush2.bf16.msra.mxu0 0
        %862 = vmatprep.subr.bf16.mxu0 0
        %863 = vmatpush2.bf16.msra.mxu0 0
        %864 = vmatprep.subr.bf16.mxu0 0
        %865 = vmatpush2.bf16.msra.mxu0 0
        %866 = vmatprep.subr.bf16.mxu0 0
        %867 = vmatpush2.bf16.msra.mxu0 0
        %868 = vmatprep.mubr.bf16.mxu0 0
        %869 = vmatmul.mubr.bf16.gmra.mxu0 %v762
        %v870 = vpop.f32.mrf.mxu0
        %v871 = vadd.f32 %v733, %v870
        %v872 = vpop.f32.mrf.mxu0
        %v873 = vadd.f32 %v733, %v872
        %v874 = vpop.f32.mrf.mxu0
        %v875 = vadd.f32 %v738, %v874
        %v876 = vpop.f32.mrf.mxu0
        %v877 = vadd.f32 %v738, %v876
        %878 = vmatprep.mubr.bf16.mxu0 0
        %879 = vmatmul.mubr.bf16.gmra.mxu0 %v765
        %v880 = vpop.f32.mrf.mxu0
        %v881 = vadd.f32 %v743, %v880
        %v882 = vpop.f32.mrf.mxu0
        %v883 = vadd.f32 %v743, %v882
        %v884 = vpop.f32.mrf.mxu0
        %v885 = vadd.f32 %v748, %v884
        %v886 = vpop.f32.mrf.mxu0
        %v887 = vadd.f32 %v748, %v886
        %888 = vdwg.mxu0
        %v889 = vtanh.pop %v818
        %v890 = vtanh.pop %v820
        %v891 = vtanh.pop %v871
        %v892 = vtanh.pop %v873
        %v893 = vtanh.pop %v822
        %v894 = vtanh.pop %v824
        %v895 = vtanh.pop %v875
        %v896 = vtanh.pop %v877
        %v897 = vtanh.pop %v828
        %v898 = vtanh.pop %v830
        %v899 = vtanh.pop %v881
        %v900 = vtanh.pop %v883
        %v901 = vtanh.pop %v832
        %v902 = vtanh.pop %v834
        %v903 = vtanh.pop %v885
        %v904 = vtanh.pop %v887
        %v905 = vld [vmem:[%s5] sm:$0xf]
        %v906 = vld [vmem:[%s5 + $0x4] sm:$0xf]
        %v907 = vld [vmem:[%s5 + $0x8] sm:$0xf]
        %v908 = vld [vmem:[%s5 + $0xc] sm:$0x1]
        %v909 = vpack.c.bf16 %v893, %v889
        %v910 = vpack.c.bf16 %v894, %v890
        %v911 = vpack.c.bf16 %v895, %v891
        %v912 = vpack.c.bf16 %v896, %v892
        %v913 = vpack.c.bf16 %v901, %v897
        %v914 = vpack.c.bf16 %v902, %v898
        %v915 = vpack.c.bf16 %v903, %v899
        %v916 = vpack.c.bf16 %v904, %v900
        %v917 = vld [vmem:[%s6] sm:$0xff]
        %v918 = vld [vmem:[%s6 + $0x8] sm:$0xff]
        %v919 = vld [vmem:[%s6 + $0x10] sm:$0xff]
        %v920 = vld [vmem:[%s6 + $0x18] sm:$0x1]
        %922 = vset.pattern.permute.xlu0 0
        %923 = vperm.xlu0 %922, %v917
        %v924 = vpop.permute.xlu0 %923
        %927 = vset.pattern.permute.xlu0 0
        %928 = vperm.xlu0 %927, %v918
        %v929 = vpop.permute.xlu0 %928
        %932 = vset.pattern.permute.xlu0 0
        %933 = vperm.xlu0 %932, %v919
        %v934 = vpop.permute.xlu0 %933
        %937 = vset.pattern.permute.xlu0 0
        %938 = vperm.xlu0 %937, %v920
        %v939 = vpop.permute.xlu0 %938
        %v945 = vunpack.c.l.b16 %v905
        %v946 = vunpack.c.l.b16 %v906
        %v947 = vunpack.c.l.b16 %v907
        %v948 = vunpack.c.l.b16 %v908
        %v949 = vpack.c.b16 %v946, %v945
        %v950 = vpack.c.b16 %v948, %v947
        %v952 = vsel %vm760, %v949, 0
        %v955 = vsel %vm760, %v950, 0
        %v958 = vand.u32 %v913, %v770
        %v961 = vand.u32 %v914, %v770
        %v964 = vand.u32 %v915, %v770
        %v967 = vand.u32 %v916, %v770
        %969 = vmatprep.subr.bf16.mxu0 0
        %970 = vmatpush1.bf16.msra.mxu0 0
        %971 = vmatprep.subr.bf16.mxu0 0
        %972 = vmatpush1.bf16.msra.mxu0 0
        %973 = vmatprep.subr.bf16.mxu0 0
        %974 = vmatpush1.bf16.msra.mxu0 0
        %975 = vmatprep.subr.bf16.mxu0 0
        %976 = vmatpush1.bf16.msra.mxu0 0
        %977 = vmatprep.subr.bf16.mxu0 0
        %978 = vmatpush1.bf16.msra.mxu0 0
        %979 = vmatprep.subr.bf16.mxu0 0
        %980 = vmatpush1.bf16.msra.mxu0 0
        %981 = vmatprep.subr.bf16.mxu0 %v961
        %982 = vmatpush1.bf16.msra.mxu0 %v958
        %983 = vmatprep.subr.bf16.mxu0 %v910
        %984 = vmatpush1.bf16.msra.mxu0 %v909
        %985 = vmatprep.subr.bf16.mxu0 0
        %986 = vmatpush2.bf16.msra.mxu0 0
        %987 = vmatprep.subr.bf16.mxu0 0
        %988 = vmatpush2.bf16.msra.mxu0 0
        %989 = vmatprep.subr.bf16.mxu0 0
        %990 = vmatpush2.bf16.msra.mxu0 0
        %991 = vmatprep.subr.bf16.mxu0 0
        %992 = vmatpush2.bf16.msra.mxu0 0
        %993 = vmatprep.subr.bf16.mxu0 0
        %994 = vmatpush2.bf16.msra.mxu0 0
        %995 = vmatprep.subr.bf16.mxu0 0
        %996 = vmatpush2.bf16.msra.mxu0 0
        %997 = vmatprep.subr.bf16.mxu0 0
        %998 = vmatpush2.bf16.msra.mxu0 0
        %999 = vmatprep.subr.bf16.mxu0 0
        %1000 = vmatpush2.bf16.msra.mxu0 0
        %1001 = vmatprep.mubr.bf16.mxu0 0
        %1002 = vmatmul.mubr.bf16.gmra.mxu0 %v952
        %v1003 = vpop.f32.mrf.mxu0
        %v1004 = vadd.f32 %v924, %v1003
        %v1005 = vpop.f32.mrf.mxu0
        %v1006 = vadd.f32 %v924, %v1005
        %v1007 = vpop.f32.mrf.mxu0
        %v1008 = vadd.f32 %v929, %v1007
        %v1009 = vpop.f32.mrf.mxu0
        %v1010 = vadd.f32 %v929, %v1009
        %1011 = vmatprep.mubr.bf16.mxu0 0
        %1012 = vmatmul.mubr.bf16.gmra.mxu0 %v955
        %v1013 = vpop.f32.mrf.mxu0
        %v1014 = vadd.f32 %v934, %v1013
        %v1015 = vpop.f32.mrf.mxu0
        %v1016 = vadd.f32 %v934, %v1015
        %v1017 = vpop.f32.mrf.mxu0
        %v1018 = vadd.f32 %v939, %v1017
        %v1019 = vpop.f32.mrf.mxu0
        %v1020 = vadd.f32 %v939, %v1019
        %1021 = vdwg.mxu0
        %1022 = vmatprep.subr.bf16.mxu0 0
        %1023 = vmatpush1.bf16.msra.mxu0 0
        %1024 = vmatprep.subr.bf16.mxu0 0
        %1025 = vmatpush1.bf16.msra.mxu0 0
        %1026 = vmatprep.subr.bf16.mxu0 0
        %1027 = vmatpush1.bf16.msra.mxu0 0
        %1028 = vmatprep.subr.bf16.mxu0 0
        %1029 = vmatpush1.bf16.msra.mxu0 0
        %1030 = vmatprep.subr.bf16.mxu0 0
        %1031 = vmatpush1.bf16.msra.mxu0 0
        %1032 = vmatprep.subr.bf16.mxu0 0
        %1033 = vmatpush1.bf16.msra.mxu0 0
        %1034 = vmatprep.subr.bf16.mxu0 %v967
        %1035 = vmatpush1.bf16.msra.mxu0 %v964
        %1036 = vmatprep.subr.bf16.mxu0 %v912
        %1037 = vmatpush1.bf16.msra.mxu0 %v911
        %1038 = vmatprep.subr.bf16.mxu0 0
        %1039 = vmatpush2.bf16.msra.mxu0 0
        %1040 = vmatprep.subr.bf16.mxu0 0
        %1041 = vmatpush2.bf16.msra.mxu0 0
        %1042 = vmatprep.subr.bf16.mxu0 0
        %1043 = vmatpush2.bf16.msra.mxu0 0
        %1044 = vmatprep.subr.bf16.mxu0 0
        %1045 = vmatpush2.bf16.msra.mxu0 0
        %1046 = vmatprep.subr.bf16.mxu0 0
        %1047 = vmatpush2.bf16.msra.mxu0 0
        %1048 = vmatprep.subr.bf16.mxu0 0
        %1049 = vmatpush2.bf16.msra.mxu0 0
        %1050 = vmatprep.subr.bf16.mxu0 0
        %1051 = vmatpush2.bf16.msra.mxu0 0
        %1052 = vmatprep.subr.bf16.mxu0 0
        %1053 = vmatpush2.bf16.msra.mxu0 0
        %1054 = vmatprep.mubr.bf16.mxu0 0
        %1055 = vmatmul.mubr.bf16.gmra.mxu0 %v952
        %v1056 = vpop.f32.mrf.mxu0
        %v1057 = vadd.f32 %v924, %v1056
        %v1058 = vpop.f32.mrf.mxu0
        %v1059 = vadd.f32 %v924, %v1058
        %v1060 = vpop.f32.mrf.mxu0
        %v1061 = vadd.f32 %v929, %v1060
        %v1062 = vpop.f32.mrf.mxu0
        %v1063 = vadd.f32 %v929, %v1062
        %1064 = vmatprep.mubr.bf16.mxu0 0
        %1065 = vmatmul.mubr.bf16.gmra.mxu0 %v955
        %v1066 = vpop.f32.mrf.mxu0
        %v1067 = vadd.f32 %v934, %v1066
        %v1068 = vpop.f32.mrf.mxu0
        %v1069 = vadd.f32 %v934, %v1068
        %v1070 = vpop.f32.mrf.mxu0
        %v1071 = vadd.f32 %v939, %v1070
        %v1072 = vpop.f32.mrf.mxu0
        %v1073 = vadd.f32 %v939, %v1072
        %1074 = vdwg.mxu0
        %v1075 = vtanh.pop %v1004
        %v1076 = vtanh.pop %v1006
        %v1077 = vtanh.pop %v1057
        %v1078 = vtanh.pop %v1059
        %v1079 = vtanh.pop %v1008
        %v1080 = vtanh.pop %v1010
        %v1081 = vtanh.pop %v1061
        %v1082 = vtanh.pop %v1063
        %v1083 = vtanh.pop %v1014
        %v1084 = vtanh.pop %v1016
        %v1085 = vtanh.pop %v1067
        %v1086 = vtanh.pop %v1069
        %v1087 = vtanh.pop %v1018
        %v1088 = vtanh.pop %v1020
        %v1089 = vtanh.pop %v1071
        %v1090 = vtanh.pop %v1073
        %v1091 = vld [vmem:[%s7] sm:$0x7]
        %v1092 = vpack.c.bf16 %v1079, %v1075
        %v1093 = vpack.c.bf16 %v1080, %v1076
        %v1094 = vpack.c.bf16 %v1081, %v1077
        %v1095 = vpack.c.bf16 %v1082, %v1078
        %v1096 = vpack.c.bf16 %v1087, %v1083
        %v1097 = vpack.c.bf16 %v1088, %v1084
        %v1098 = vpack.c.bf16 %v1089, %v1085
        %v1099 = vpack.c.bf16 %v1090, %v1086
        %v1100 = vld [vmem:[%s8] sm:$0x1f]
        %1102 = vset.pattern.permute.xlu0 0
        %1103 = vperm.xlu0 %1102, %v1100
        %v1104 = vpop.permute.xlu0 %1103
        %v1107 = vsel %vm760, %v1091, 0
        %v1110 = vand.u32 %v1096, %v770
        %v1113 = vand.u32 %v1097, %v770
        %v1116 = vand.u32 %v1098, %v770
        %v1119 = vand.u32 %v1099, %v770
        %1121 = vmatprep.subr.bf16.mxu0 0
        %1122 = vmatpush1.bf16.msra.mxu0 0
        %1123 = vmatprep.subr.bf16.mxu0 0
        %1124 = vmatpush1.bf16.msra.mxu0 0
        %1125 = vmatprep.subr.bf16.mxu0 0
        %1126 = vmatpush1.bf16.msra.mxu0 0
        %1127 = vmatprep.subr.bf16.mxu0 0
        %1128 = vmatpush1.bf16.msra.mxu0 0
        %1129 = vmatprep.subr.bf16.mxu0 0
        %1130 = vmatpush1.bf16.msra.mxu0 0
        %1131 = vmatprep.subr.bf16.mxu0 0
        %1132 = vmatpush1.bf16.msra.mxu0 0
        %1133 = vmatprep.subr.bf16.mxu0 %v1113
        %1134 = vmatpush1.bf16.msra.mxu0 %v1110
        %1135 = vmatprep.subr.bf16.mxu0 %v1093
        %1136 = vmatpush1.bf16.msra.mxu0 %v1092
        %1137 = vmatprep.subr.bf16.mxu0 0
        %1138 = vmatpush2.bf16.msra.mxu0 0
        %1139 = vmatprep.subr.bf16.mxu0 0
        %1140 = vmatpush2.bf16.msra.mxu0 0
        %1141 = vmatprep.subr.bf16.mxu0 0
        %1142 = vmatpush2.bf16.msra.mxu0 0
        %1143 = vmatprep.subr.bf16.mxu0 0
        %1144 = vmatpush2.bf16.msra.mxu0 0
        %1145 = vmatprep.subr.bf16.mxu0 0
        %1146 = vmatpush2.bf16.msra.mxu0 0
        %1147 = vmatprep.subr.bf16.mxu0 0
        %1148 = vmatpush2.bf16.msra.mxu0 0
        %1149 = vmatprep.subr.bf16.mxu0 0
        %1150 = vmatpush2.bf16.msra.mxu0 0
        %1151 = vmatprep.subr.bf16.mxu0 0
        %1152 = vmatpush2.bf16.msra.mxu0 0
        %1153 = vmatprep.mubr.bf16.mxu0 0
        %1154 = vmatmul.mubr.bf16.gmra.mxu0 %v1107
        %v1155 = vpop.f32.mrf.mxu0
        %v1156 = vadd.f32 %v1104, %v1155
        %v1157 = vpop.f32.mrf.mxu0
        %v1158 = vadd.f32 %v1104, %v1157
        %v1159 = vpop.f32.mrf.mxu0
        %v1160 = vpop.f32.mrf.mxu0
        %1161 = vdwg.mxu0
        %1162 = vmatprep.subr.bf16.mxu0 0
        %1163 = vmatpush1.bf16.msra.mxu0 0
        %1164 = vmatprep.subr.bf16.mxu0 0
        %1165 = vmatpush1.bf16.msra.mxu0 0
        %1166 = vmatprep.subr.bf16.mxu0 0
        %1167 = vmatpush1.bf16.msra.mxu0 0
        %1168 = vmatprep.subr.bf16.mxu0 0
        %1169 = vmatpush1.bf16.msra.mxu0 0
        %1170 = vmatprep.subr.bf16.mxu0 0
        %1171 = vmatpush1.bf16.msra.mxu0 0
        %1172 = vmatprep.subr.bf16.mxu0 0
        %1173 = vmatpush1.bf16.msra.mxu0 0
        %1174 = vmatprep.subr.bf16.mxu0 %v1119
        %1175 = vmatpush1.bf16.msra.mxu0 %v1116
        %1176 = vmatprep.subr.bf16.mxu0 %v1095
        %1177 = vmatpush1.bf16.msra.mxu0 %v1094
        %1178 = vmatprep.subr.bf16.mxu0 0
        %1179 = vmatpush2.bf16.msra.mxu0 0
        %1180 = vmatprep.subr.bf16.mxu0 0
        %1181 = vmatpush2.bf16.msra.mxu0 0
        %1182 = vmatprep.subr.bf16.mxu0 0
        %1183 = vmatpush2.bf16.msra.mxu0 0
        %1184 = vmatprep.subr.bf16.mxu0 0
        %1185 = vmatpush2.bf16.msra.mxu0 0
        %1186 = vmatprep.subr.bf16.mxu0 0
        %1187 = vmatpush2.bf16.msra.mxu0 0
        %1188 = vmatprep.subr.bf16.mxu0 0
        %1189 = vmatpush2.bf16.msra.mxu0 0
        %1190 = vmatprep.subr.bf16.mxu0 0
        %1191 = vmatpush2.bf16.msra.mxu0 0
        %1192 = vmatprep.subr.bf16.mxu0 0
        %1193 = vmatpush2.bf16.msra.mxu0 0
        %1194 = vmatprep.mubr.bf16.mxu0 0
        %1195 = vmatmul.mubr.bf16.gmra.mxu0 %v1107
        %v1196 = vpop.f32.mrf.mxu0
        %v1197 = vadd.f32 %v1104, %v1196
        %v1198 = vpop.f32.mrf.mxu0
        %v1199 = vadd.f32 %v1104, %v1198
        %v1200 = vpop.f32.mrf.mxu0
        %v1201 = vpop.f32.mrf.mxu0
        %1202 = vdwg.mxu0
        %v1203 = vtanh.pop %v1156
        %v1204 = vtanh.pop %v1158
        %v1205 = vtanh.pop %v1197
        %v1206 = vtanh.pop %v1199
        %1207 = vxpose.xlu0.b32.start [1/16] %v1203, 128
        %1208 = vxpose.xlu0.b32.cont [2/16] 0.0, 128
        %1209 = vxpose.xlu0.b32.cont [3/16] 0.0, 128
        %1210 = vxpose.xlu0.b32.cont [4/16] 0.0, 128
        %1211 = vxpose.xlu0.b32.cont [5/16] 0.0, 128
        %1212 = vxpose.xlu0.b32.cont [6/16] 0.0, 128
        %1213 = vxpose.xlu0.b32.cont [7/16] 0.0, 128
        %1214 = vxpose.xlu0.b32.cont [8/16] 0.0, 128
        %1215 = vxpose.xlu0.b32.cont [9/16] 0.0, 128
        %1216 = vxpose.xlu0.b32.cont [10/16] 0.0, 128
        %1217 = vxpose.xlu0.b32.cont [11/16] 0.0, 128
        %1218 = vxpose.xlu0.b32.cont [12/16] 0.0, 128
        %1219 = vxpose.xlu0.b32.cont [13/16] 0.0, 128
        %1220 = vxpose.xlu0.b32.cont [14/16] 0.0, 128
        %1221 = vxpose.xlu0.b32.cont [15/16] 0.0, 128
        %1222 = vxpose.xlu0.b32.end [16/16] 0.0, 128
        %v1223 = vpop.trf.xlu0
        %v1224 = vpop.trf.xlu0
        %v1225 = vpop.trf.xlu0
        %v1226 = vpop.trf.xlu0
        %v1227 = vpop.trf.xlu0
        %v1228 = vpop.trf.xlu0
        %v1229 = vpop.trf.xlu0
        %v1230 = vpop.trf.xlu0
        %v1231 = vpop.trf.xlu0
        %v1232 = vpop.trf.xlu0
        %v1233 = vpop.trf.xlu0
        %v1234 = vpop.trf.xlu0
        %v1235 = vpop.trf.xlu0
        %v1236 = vpop.trf.xlu0
        %v1237 = vpop.trf.xlu0
        %v1238 = vpop.trf.xlu0
        %1239 = vxpose.xlu0.b32.start [1/16] %v1204, 128
        %1240 = vxpose.xlu0.b32.cont [2/16] 0.0, 128
        %1241 = vxpose.xlu0.b32.cont [3/16] 0.0, 128
        %1242 = vxpose.xlu0.b32.cont [4/16] 0.0, 128
        %1243 = vxpose.xlu0.b32.cont [5/16] 0.0, 128
        %1244 = vxpose.xlu0.b32.cont [6/16] 0.0, 128
        %1245 = vxpose.xlu0.b32.cont [7/16] 0.0, 128
        %1246 = vxpose.xlu0.b32.cont [8/16] 0.0, 128
        %1247 = vxpose.xlu0.b32.cont [9/16] 0.0, 128
        %1248 = vxpose.xlu0.b32.cont [10/16] 0.0, 128
        %1249 = vxpose.xlu0.b32.cont [11/16] 0.0, 128
        %1250 = vxpose.xlu0.b32.cont [12/16] 0.0, 128
        %1251 = vxpose.xlu0.b32.cont [13/16] 0.0, 128
        %1252 = vxpose.xlu0.b32.cont [14/16] 0.0, 128
        %1253 = vxpose.xlu0.b32.cont [15/16] 0.0, 128
        %1254 = vxpose.xlu0.b32.end [16/16] 0.0, 128
        %v1255 = vpop.trf.xlu0
        %v1256 = vpop.trf.xlu0
        %v1257 = vpop.trf.xlu0
        %v1258 = vpop.trf.xlu0
        %v1259 = vpop.trf.xlu0
        %v1260 = vpop.trf.xlu0
        %v1261 = vpop.trf.xlu0
        %v1262 = vpop.trf.xlu0
        %v1263 = vpop.trf.xlu0
        %v1264 = vpop.trf.xlu0
        %v1265 = vpop.trf.xlu0
        %v1266 = vpop.trf.xlu0
        %v1267 = vpop.trf.xlu0
        %v1268 = vpop.trf.xlu0
        %v1269 = vpop.trf.xlu0
        %v1270 = vpop.trf.xlu0
        %1271 = vxpose.xlu0.b32.start [1/16] %v1205, 128
        %1272 = vxpose.xlu0.b32.cont [2/16] 0.0, 128
        %1273 = vxpose.xlu0.b32.cont [3/16] 0.0, 128
        %1274 = vxpose.xlu0.b32.cont [4/16] 0.0, 128
        %1275 = vxpose.xlu0.b32.cont [5/16] 0.0, 128
        %1276 = vxpose.xlu0.b32.cont [6/16] 0.0, 128
        %1277 = vxpose.xlu0.b32.cont [7/16] 0.0, 128
        %1278 = vxpose.xlu0.b32.cont [8/16] 0.0, 128
        %1279 = vxpose.xlu0.b32.cont [9/16] 0.0, 128
        %1280 = vxpose.xlu0.b32.cont [10/16] 0.0, 128
        %1281 = vxpose.xlu0.b32.cont [11/16] 0.0, 128
        %1282 = vxpose.xlu0.b32.cont [12/16] 0.0, 128
        %1283 = vxpose.xlu0.b32.cont [13/16] 0.0, 128
        %1284 = vxpose.xlu0.b32.cont [14/16] 0.0, 128
        %1285 = vxpose.xlu0.b32.cont [15/16] 0.0, 128
        %1286 = vxpose.xlu0.b32.end [16/16] 0.0, 128
        %v1287 = vpop.trf.xlu0
        %v1288 = vpop.trf.xlu0
        %v1289 = vpop.trf.xlu0
        %v1290 = vpop.trf.xlu0
        %v1291 = vpop.trf.xlu0
        %v1292 = vpop.trf.xlu0
        %v1293 = vpop.trf.xlu0
        %v1294 = vpop.trf.xlu0
        %v1295 = vpop.trf.xlu0
        %v1296 = vpop.trf.xlu0
        %v1297 = vpop.trf.xlu0
        %v1298 = vpop.trf.xlu0
        %v1299 = vpop.trf.xlu0
        %v1300 = vpop.trf.xlu0
        %v1301 = vpop.trf.xlu0
        %v1302 = vpop.trf.xlu0
        %1303 = vxpose.xlu0.b32.start [1/16] %v1206, 128
        %1304 = vxpose.xlu0.b32.cont [2/16] 0.0, 128
        %1305 = vxpose.xlu0.b32.cont [3/16] 0.0, 128
        %1306 = vxpose.xlu0.b32.cont [4/16] 0.0, 128
        %1307 = vxpose.xlu0.b32.cont [5/16] 0.0, 128
        %1308 = vxpose.xlu0.b32.cont [6/16] 0.0, 128
        %1309 = vxpose.xlu0.b32.cont [7/16] 0.0, 128
        %1310 = vxpose.xlu0.b32.cont [8/16] 0.0, 128
        %1311 = vxpose.xlu0.b32.cont [9/16] 0.0, 128
        %1312 = vxpose.xlu0.b32.cont [10/16] 0.0, 128
        %1313 = vxpose.xlu0.b32.cont [11/16] 0.0, 128
        %1314 = vxpose.xlu0.b32.cont [12/16] 0.0, 128
        %1315 = vxpose.xlu0.b32.cont [13/16] 0.0, 128
        %1316 = vxpose.xlu0.b32.cont [14/16] 0.0, 128
        %1317 = vxpose.xlu0.b32.cont [15/16] 0.0, 128
        %1318 = vxpose.xlu0.b32.end [16/16] 0.0, 128
        %v1319 = vpop.trf.xlu0
        %v1320 = vpop.trf.xlu0
        %v1321 = vpop.trf.xlu0
        %v1322 = vpop.trf.xlu0
        %v1323 = vpop.trf.xlu0
        %v1324 = vpop.trf.xlu0
        %v1325 = vpop.trf.xlu0
        %v1326 = vpop.trf.xlu0
        %v1327 = vpop.trf.xlu0
        %v1328 = vpop.trf.xlu0
        %v1329 = vpop.trf.xlu0
        %v1330 = vpop.trf.xlu0
        %v1331 = vpop.trf.xlu0
        %v1332 = vpop.trf.xlu0
        %v1333 = vpop.trf.xlu0
        %v1334 = vpop.trf.xlu0
        %1335 = vst.msk [vmem:[%s334] sm:$0xff] %vm489, %v1223
        %1336 = vst.msk [vmem:[%s334 + $0x8] sm:$0xff] %vm489, %v1224
        %1337 = vst.msk [vmem:[%s334 + $0x10] sm:$0xff] %vm489, %v1225
        %1338 = vst.msk [vmem:[%s334 + $0x18] sm:$0xff] %vm489, %v1226
        %1339 = vst.msk [vmem:[%s334 + $0x20] sm:$0xff] %vm489, %v1227
        %1340 = vst.msk [vmem:[%s334 + $0x28] sm:$0xff] %vm489, %v1228
        %1341 = vst.msk [vmem:[%s334 + $0x30] sm:$0xff] %vm489, %v1229
        %1342 = vst.msk [vmem:[%s334 + $0x38] sm:$0xff] %vm489, %v1230
        %1343 = vst.msk [vmem:[%s334 + $0x40] sm:$0xff] %vm489, %v1231
        %1344 = vst.msk [vmem:[%s334 + $0x48] sm:$0xff] %vm489, %v1232
        %1345 = vst.msk [vmem:[%s334 + $0x50] sm:$0xff] %vm489, %v1233
        %1346 = vst.msk [vmem:[%s334 + $0x58] sm:$0xff] %vm489, %v1234
        %1347 = vst.msk [vmem:[%s334 + $0x60] sm:$0xff] %vm489, %v1235
        %1348 = vst.msk [vmem:[%s334 + $0x68] sm:$0xff] %vm489, %v1236
        %1349 = vst.msk [vmem:[%s334 + $0x70] sm:$0xff] %vm489, %v1237
        %1350 = vst.msk [vmem:[%s334 + $0x78] sm:$0xff] %vm489, %v1238
        %1351 = vst.msk [vmem:[%s334 + $0x80] sm:$0xff] %vm489, %v1255
        %1352 = vst.msk [vmem:[%s334 + $0x88] sm:$0xff] %vm489, %v1256
        %1353 = vst.msk [vmem:[%s334 + $0x90] sm:$0xff] %vm489, %v1257
        %1354 = vst.msk [vmem:[%s334 + $0x98] sm:$0xff] %vm489, %v1258
        %1355 = vst.msk [vmem:[%s334 + $0xa0] sm:$0xff] %vm489, %v1259
        %1356 = vst.msk [vmem:[%s334 + $0xa8] sm:$0xff] %vm489, %v1260
        %1357 = vst.msk [vmem:[%s334 + $0xb0] sm:$0xff] %vm489, %v1261
        %1358 = vst.msk [vmem:[%s334 + $0xb8] sm:$0xff] %vm489, %v1262
        %1359 = vst.msk [vmem:[%s334 + $0xc0] sm:$0xff] %vm489, %v1263
        %1360 = vst.msk [vmem:[%s334 + $0xc8] sm:$0xff] %vm489, %v1264
        %1361 = vst.msk [vmem:[%s334 + $0xd0] sm:$0xff] %vm489, %v1265
        %1362 = vst.msk [vmem:[%s334 + $0xd8] sm:$0xff] %vm489, %v1266
        %1363 = vst.msk [vmem:[%s334 + $0xe0] sm:$0xff] %vm489, %v1267
        %1364 = vst.msk [vmem:[%s334 + $0xe8] sm:$0xff] %vm489, %v1268
        %1365 = vst.msk [vmem:[%s334 + $0xf0] sm:$0xff] %vm489, %v1269
        %1366 = vst.msk [vmem:[%s334 + $0xf8] sm:$0xff] %vm489, %v1270
        %1367 = vst.msk [vmem:[%s334 + $0x100] sm:$0xff] %vm489, %v1287
        %1368 = vst.msk [vmem:[%s334 + $0x108] sm:$0xff] %vm489, %v1288
        %1369 = vst.msk [vmem:[%s334 + $0x110] sm:$0xff] %vm489, %v1289
        %1370 = vst.msk [vmem:[%s334 + $0x118] sm:$0xff] %vm489, %v1290
        %1371 = vst.msk [vmem:[%s334 + $0x120] sm:$0xff] %vm489, %v1291
        %1372 = vst.msk [vmem:[%s334 + $0x128] sm:$0xff] %vm489, %v1292
        %1373 = vst.msk [vmem:[%s334 + $0x130] sm:$0xff] %vm489, %v1293
        %1374 = vst.msk [vmem:[%s334 + $0x138] sm:$0xff] %vm489, %v1294
        %1375 = vst.msk [vmem:[%s334 + $0x140] sm:$0xff] %vm489, %v1295
        %1376 = vst.msk [vmem:[%s334 + $0x148] sm:$0xff] %vm489, %v1296
        %1377 = vst.msk [vmem:[%s334 + $0x150] sm:$0xff] %vm489, %v1297
        %1378 = vst.msk [vmem:[%s334 + $0x158] sm:$0xff] %vm489, %v1298
        %1379 = vst.msk [vmem:[%s334 + $0x160] sm:$0xff] %vm489, %v1299
        %1380 = vst.msk [vmem:[%s334 + $0x168] sm:$0xff] %vm489, %v1300
        %1381 = vst.msk [vmem:[%s334 + $0x170] sm:$0xff] %vm489, %v1301
        %1382 = vst.msk [vmem:[%s334 + $0x178] sm:$0xff] %vm489, %v1302
        %1383 = vst.msk [vmem:[%s334 + $0x180] sm:$0xff] %vm489, %v1319
        %1384 = vst.msk [vmem:[%s334 + $0x188] sm:$0xff] %vm489, %v1320
        %1385 = vst.msk [vmem:[%s334 + $0x190] sm:$0xff] %vm489, %v1321
        %1386 = vst.msk [vmem:[%s334 + $0x198] sm:$0xff] %vm489, %v1322
        %1387 = vst.msk [vmem:[%s334 + $0x1a0] sm:$0xff] %vm489, %v1323
        %1388 = vst.msk [vmem:[%s334 + $0x1a8] sm:$0xff] %vm489, %v1324
        %1389 = vst.msk [vmem:[%s334 + $0x1b0] sm:$0xff] %vm489, %v1325
        %1390 = vst.msk [vmem:[%s334 + $0x1b8] sm:$0xff] %vm489, %v1326
        %1391 = vst.msk [vmem:[%s334 + $0x1c0] sm:$0xff] %vm489, %v1327
        %1392 = vst.msk [vmem:[%s334 + $0x1c8] sm:$0xff] %vm489, %v1328
        %1393 = vst.msk [vmem:[%s334 + $0x1d0] sm:$0xff] %vm489, %v1329
        %1394 = vst.msk [vmem:[%s334 + $0x1d8] sm:$0xff] %vm489, %v1330
        %1395 = vst.msk [vmem:[%s334 + $0x1e0] sm:$0xff] %vm489, %v1331
        %1396 = vst.msk [vmem:[%s334 + $0x1e8] sm:$0xff] %vm489, %v1332
        %1397 = vst.msk [vmem:[%s334 + $0x1f0] sm:$0xff] %vm489, %v1333
        %1398 = vst.msk [vmem:[%s334 + $0x1f8] sm:$0xff] %vm489, %v1334
        %s1399 = sand.u32 %s222, 1
        %s1400 = sand.u32 %s222, 1
        %s1401 = smul.addr %s1400, 512
        %s1402 = scalar_lea.vmem [#allocation2], %s1401
        // Predicated region
        $region57: #{tpu_custom_call.1} parent=55 // pred_check
          %p1403 = pneg %p232
        $region58: #{tpu_custom_call.1} parent=55 // pred_check_branch
          %1405 = sbr.rel (%p1403) target = $region60
        $region59: #{tpu_custom_call.1} parent=55 // pred_region
          %s1406 = smul.u32 64, %s20
          %s1407 = ssub.s32 150, %s1406
          %p1408 = scmp.lt.s32.totalorder %s1407, 64
          %s1409 = scalar_select %p1408, %s1407, 64
          %s1410 = smul.u32 128, %s1409
          %p1411 = scmp.ne.s32.totalorder 0, %s1410
          %s1412 = smul.addr %s1406, 8
          %s1413 = scalar_lea.vmem %s9, %s1412
          // Predicated region
          $region61: #{tpu_custom_call.1} parent=59 // pred_check
            %p1414 = pneg %p1411
          $region62: #{tpu_custom_call.1} parent=59 // pred_check_branch
            %1416 = sbr.rel (%p1414) target = $region64
          $region63: #{tpu_custom_call.1} parent=59 // pred_region
            // Predicated region
            $region65: #{tpu_custom_call.1} parent=63 // pred_check
              _
            $region66: #{tpu_custom_call.1} parent=63 // pred_check_branch
              %1418 = sbr.rel (0) target = $region68
            $region67: #{tpu_custom_call.1} parent=63 // pred_region
              // Predicated region
              $region87: #{tpu_custom_call.1} parent=67 // pred_check
                _
              $region88: #{tpu_custom_call.1} parent=67 // pred_check_branch
                %1594 = sbr.rel (0) target = $region90
              $region89: #{tpu_custom_call.1} parent=67 // pred_region
                %s1595 = sshrl.u32 %s1409, 6
                // While loop
                $region91: #{tpu_custom_call.1} parent=89 // loop_pre_header
                  _
                $region92: #{tpu_custom_call.1} parent=89 // loop_header
                  %s1597 = sphi 0, %s1599
                  %p1598 = scmp.ge.s32.totalorder %s1597, %s1595
                  %s1602 = sphi 0, %s1735
                  %s1603 = sphi %s1402, %s1738
                  %s1604 = sphi %s1413, %s1739
                $region93: #{tpu_custom_call.1} parent=89 // loop_header_branch
                  %1601 = sbr.rel (%p1598) target = $region97
                $region94: #{tpu_custom_call.1} parent=89 // loop_body
                  %v1605 = vld [vmem:[%s1603] sm:$0xff]
                  %1606 = vst [vmem:[%s1604] sm:$0xff] %v1605
                  %v1607 = vld [vmem:[%s1603 + $0x8] sm:$0xff]
                  %1608 = vst [vmem:[%s1604 + $0x8] sm:$0xff] %v1607
                  %v1609 = vld [vmem:[%s1603 + $0x10] sm:$0xff]
                  %1610 = vst [vmem:[%s1604 + $0x10] sm:$0xff] %v1609
                  %v1611 = vld [vmem:[%s1603 + $0x18] sm:$0xff]
                  %1612 = vst [vmem:[%s1604 + $0x18] sm:$0xff] %v1611
                  %v1613 = vld [vmem:[%s1603 + $0x20] sm:$0xff]
                  %1614 = vst [vmem:[%s1604 + $0x20] sm:$0xff] %v1613
                  %v1615 = vld [vmem:[%s1603 + $0x28] sm:$0xff]
                  %1616 = vst [vmem:[%s1604 + $0x28] sm:$0xff] %v1615
                  %v1617 = vld [vmem:[%s1603 + $0x30] sm:$0xff]
                  %1618 = vst [vmem:[%s1604 + $0x30] sm:$0xff] %v1617
                  %v1619 = vld [vmem:[%s1603 + $0x38] sm:$0xff]
                  %1620 = vst [vmem:[%s1604 + $0x38] sm:$0xff] %v1619
                  %v1621 = vld [vmem:[%s1603 + $0x40] sm:$0xff]
                  %1622 = vst [vmem:[%s1604 + $0x40] sm:$0xff] %v1621
                  %v1623 = vld [vmem:[%s1603 + $0x48] sm:$0xff]
                  %1624 = vst [vmem:[%s1604 + $0x48] sm:$0xff] %v1623
                  %v1625 = vld [vmem:[%s1603 + $0x50] sm:$0xff]
                  %1626 = vst [vmem:[%s1604 + $0x50] sm:$0xff] %v1625
                  %v1627 = vld [vmem:[%s1603 + $0x58] sm:$0xff]
                  %1628 = vst [vmem:[%s1604 + $0x58] sm:$0xff] %v1627
                  %v1629 = vld [vmem:[%s1603 + $0x60] sm:$0xff]
                  %1630 = vst [vmem:[%s1604 + $0x60] sm:$0xff] %v1629
                  %v1631 = vld [vmem:[%s1603 + $0x68] sm:$0xff]
                  %1632 = vst [vmem:[%s1604 + $0x68] sm:$0xff] %v1631
                  %v1633 = vld [vmem:[%s1603 + $0x70] sm:$0xff]
                  %1634 = vst [vmem:[%s1604 + $0x70] sm:$0xff] %v1633
                  %v1635 = vld [vmem:[%s1603 + $0x78] sm:$0xff]
                  %1636 = vst [vmem:[%s1604 + $0x78] sm:$0xff] %v1635
                  %v1637 = vld [vmem:[%s1603 + $0x80] sm:$0xff]
                  %1638 = vst [vmem:[%s1604 + $0x80] sm:$0xff] %v1637
                  %v1639 = vld [vmem:[%s1603 + $0x88] sm:$0xff]
                  %1640 = vst [vmem:[%s1604 + $0x88] sm:$0xff] %v1639
                  %v1641 = vld [vmem:[%s1603 + $0x90] sm:$0xff]
                  %1642 = vst [vmem:[%s1604 + $0x90] sm:$0xff] %v1641
                  %v1643 = vld [vmem:[%s1603 + $0x98] sm:$0xff]
                  %1644 = vst [vmem:[%s1604 + $0x98] sm:$0xff] %v1643
                  %v1645 = vld [vmem:[%s1603 + $0xa0] sm:$0xff]
                  %1646 = vst [vmem:[%s1604 + $0xa0] sm:$0xff] %v1645
                  %v1647 = vld [vmem:[%s1603 + $0xa8] sm:$0xff]
                  %1648 = vst [vmem:[%s1604 + $0xa8] sm:$0xff] %v1647
                  %v1649 = vld [vmem:[%s1603 + $0xb0] sm:$0xff]
                  %1650 = vst [vmem:[%s1604 + $0xb0] sm:$0xff] %v1649
                  %v1651 = vld [vmem:[%s1603 + $0xb8] sm:$0xff]
                  %1652 = vst [vmem:[%s1604 + $0xb8] sm:$0xff] %v1651
                  %v1653 = vld [vmem:[%s1603 + $0xc0] sm:$0xff]
                  %1654 = vst [vmem:[%s1604 + $0xc0] sm:$0xff] %v1653
                  %v1655 = vld [vmem:[%s1603 + $0xc8] sm:$0xff]
                  %1656 = vst [vmem:[%s1604 + $0xc8] sm:$0xff] %v1655
                  %v1657 = vld [vmem:[%s1603 + $0xd0] sm:$0xff]
                  %1658 = vst [vmem:[%s1604 + $0xd0] sm:$0xff] %v1657
                  %v1659 = vld [vmem:[%s1603 + $0xd8] sm:$0xff]
                  %1660 = vst [vmem:[%s1604 + $0xd8] sm:$0xff] %v1659
                  %v1661 = vld [vmem:[%s1603 + $0xe0] sm:$0xff]
                  %1662 = vst [vmem:[%s1604 + $0xe0] sm:$0xff] %v1661
                  %v1663 = vld [vmem:[%s1603 + $0xe8] sm:$0xff]
                  %1664 = vst [vmem:[%s1604 + $0xe8] sm:$0xff] %v1663
                  %v1665 = vld [vmem:[%s1603 + $0xf0] sm:$0xff]
                  %1666 = vst [vmem:[%s1604 + $0xf0] sm:$0xff] %v1665
                  %v1667 = vld [vmem:[%s1603 + $0xf8] sm:$0xff]
                  %1668 = vst [vmem:[%s1604 + $0xf8] sm:$0xff] %v1667
                  %v1669 = vld [vmem:[%s1603 + $0x100] sm:$0xff]
                  %1670 = vst [vmem:[%s1604 + $0x100] sm:$0xff] %v1669
                  %v1671 = vld [vmem:[%s1603 + $0x108] sm:$0xff]
                  %1672 = vst [vmem:[%s1604 + $0x108] sm:$0xff] %v1671
                  %v1673 = vld [vmem:[%s1603 + $0x110] sm:$0xff]
                  %1674 = vst [vmem:[%s1604 + $0x110] sm:$0xff] %v1673
                  %v1675 = vld [vmem:[%s1603 + $0x118] sm:$0xff]
                  %1676 = vst [vmem:[%s1604 + $0x118] sm:$0xff] %v1675
                  %v1677 = vld [vmem:[%s1603 + $0x120] sm:$0xff]
                  %1678 = vst [vmem:[%s1604 + $0x120] sm:$0xff] %v1677
                  %v1679 = vld [vmem:[%s1603 + $0x128] sm:$0xff]
                  %1680 = vst [vmem:[%s1604 + $0x128] sm:$0xff] %v1679
                  %v1681 = vld [vmem:[%s1603 + $0x130] sm:$0xff]
                  %1682 = vst [vmem:[%s1604 + $0x130] sm:$0xff] %v1681
                  %v1683 = vld [vmem:[%s1603 + $0x138] sm:$0xff]
                  %1684 = vst [vmem:[%s1604 + $0x138] sm:$0xff] %v1683
                  %v1685 = vld [vmem:[%s1603 + $0x140] sm:$0xff]
                  %1686 = vst [vmem:[%s1604 + $0x140] sm:$0xff] %v1685
                  %v1687 = vld [vmem:[%s1603 + $0x148] sm:$0xff]
                  %1688 = vst [vmem:[%s1604 + $0x148] sm:$0xff] %v1687
                  %v1689 = vld [vmem:[%s1603 + $0x150] sm:$0xff]
                  %1690 = vst [vmem:[%s1604 + $0x150] sm:$0xff] %v1689
                  %v1691 = vld [vmem:[%s1603 + $0x158] sm:$0xff]
                  %1692 = vst [vmem:[%s1604 + $0x158] sm:$0xff] %v1691
                  %v1693 = vld [vmem:[%s1603 + $0x160] sm:$0xff]
                  %1694 = vst [vmem:[%s1604 + $0x160] sm:$0xff] %v1693
                  %v1695 = vld [vmem:[%s1603 + $0x168] sm:$0xff]
                  %1696 = vst [vmem:[%s1604 + $0x168] sm:$0xff] %v1695
                  %v1697 = vld [vmem:[%s1603 + $0x170] sm:$0xff]
                  %1698 = vst [vmem:[%s1604 + $0x170] sm:$0xff] %v1697
                  %v1699 = vld [vmem:[%s1603 + $0x178] sm:$0xff]
                  %1700 = vst [vmem:[%s1604 + $0x178] sm:$0xff] %v1699
                  %v1701 = vld [vmem:[%s1603 + $0x180] sm:$0xff]
                  %1702 = vst [vmem:[%s1604 + $0x180] sm:$0xff] %v1701
                  %v1703 = vld [vmem:[%s1603 + $0x188] sm:$0xff]
                  %1704 = vst [vmem:[%s1604 + $0x188] sm:$0xff] %v1703
                  %v1705 = vld [vmem:[%s1603 + $0x190] sm:$0xff]
                  %1706 = vst [vmem:[%s1604 + $0x190] sm:$0xff] %v1705
                  %v1707 = vld [vmem:[%s1603 + $0x198] sm:$0xff]
                  %1708 = vst [vmem:[%s1604 + $0x198] sm:$0xff] %v1707
                  %v1709 = vld [vmem:[%s1603 + $0x1a0] sm:$0xff]
                  %1710 = vst [vmem:[%s1604 + $0x1a0] sm:$0xff] %v1709
                  %v1711 = vld [vmem:[%s1603 + $0x1a8] sm:$0xff]
                  %1712 = vst [vmem:[%s1604 + $0x1a8] sm:$0xff] %v1711
                  %v1713 = vld [vmem:[%s1603 + $0x1b0] sm:$0xff]
                  %1714 = vst [vmem:[%s1604 + $0x1b0] sm:$0xff] %v1713
                  %v1715 = vld [vmem:[%s1603 + $0x1b8] sm:$0xff]
                  %1716 = vst [vmem:[%s1604 + $0x1b8] sm:$0xff] %v1715
                  %v1717 = vld [vmem:[%s1603 + $0x1c0] sm:$0xff]
                  %1718 = vst [vmem:[%s1604 + $0x1c0] sm:$0xff] %v1717
                  %v1719 = vld [vmem:[%s1603 + $0x1c8] sm:$0xff]
                  %1720 = vst [vmem:[%s1604 + $0x1c8] sm:$0xff] %v1719
                  %v1721 = vld [vmem:[%s1603 + $0x1d0] sm:$0xff]
                  %1722 = vst [vmem:[%s1604 + $0x1d0] sm:$0xff] %v1721
                  %v1723 = vld [vmem:[%s1603 + $0x1d8] sm:$0xff]
                  %1724 = vst [vmem:[%s1604 + $0x1d8] sm:$0xff] %v1723
                  %v1725 = vld [vmem:[%s1603 + $0x1e0] sm:$0xff]
                  %1726 = vst [vmem:[%s1604 + $0x1e0] sm:$0xff] %v1725
                  %v1727 = vld [vmem:[%s1603 + $0x1e8] sm:$0xff]
                  %1728 = vst [vmem:[%s1604 + $0x1e8] sm:$0xff] %v1727
                  %v1729 = vld [vmem:[%s1603 + $0x1f0] sm:$0xff]
                  %1730 = vst [vmem:[%s1604 + $0x1f0] sm:$0xff] %v1729
                  %v1731 = vld [vmem:[%s1603 + $0x1f8] sm:$0xff]
                  %1732 = vst [vmem:[%s1604 + $0x1f8] sm:$0xff] %v1731
                  %s1733 = sadd.s32 1, %s1602
                  %p1734 = scmp.ge.s32.totalorder %s1733, %s1595
                  %s1735 = scalar_select %p1734, 0, %s1733
                  %s1736 = smul.u32 %s1735, 512
                  %s1737 = smul.u32 %s1735, 512
                  %s1738 = scalar_lea.vmem %s1402, %s1736 [#allocation2]
                  %s1739 = scalar_lea.vmem %s1413, %s1737
                $region95: #{tpu_custom_call.1} parent=89 // loop_footer
                  %s1599 = sadd.s32 %s1597, 1
                $region96: #{tpu_custom_call.1} parent=89 // loop_footer_branch
                  %1596 = sbr.rel target = $region92
                $region97: #{tpu_custom_call.1} parent=89 // loop_exit
                  _
                %s1740 = sshrl.u32 %s1409, 6
                %s1741 = sand.u32 %s1409, 63
                %s1742 = smul.u32 %s1740, 64
                %s1743 = smul.u32 8, %s1742
                %s1744 = scalar_lea.vmem %s1402, %s1743 [#allocation2]
                %s1745 = smul.u32 8, %s1742
                %s1746 = scalar_lea.vmem %s1413, %s1745
                // While loop
                $region98: #{tpu_custom_call.1} parent=89 // loop_pre_header
                  _
                $region99: #{tpu_custom_call.1} parent=89 // loop_header
                  %s1748 = sphi 0, %s1750
                  %p1749 = scmp.ge.s32.totalorder %s1748, %s1741
                  %s1753 = sphi 0, %s1760
                  %s1754 = sphi %s1744, %s1763
                  %s1755 = sphi %s1746, %s1764
                $region100: #{tpu_custom_call.1} parent=89 // loop_header_branch
                  %1752 = sbr.rel (%p1749) target = $region104
                $region101: #{tpu_custom_call.1} parent=89 // loop_body
                  %v1756 = vld [vmem:[%s1754] sm:$0xff]
                  %1757 = vst [vmem:[%s1755] sm:$0xff] %v1756
                  %s1758 = sadd.s32 1, %s1753
                  %p1759 = scmp.ge.s32.totalorder %s1758, %s1741
                  %s1760 = scalar_select %p1759, 0, %s1758
                  %s1761 = smul.u32 %s1760, 8
                  %s1762 = smul.u32 %s1760, 8
                  %s1763 = scalar_lea.vmem %s1744, %s1761 [#allocation2]
                  %s1764 = scalar_lea.vmem %s1746, %s1762
                $region102: #{tpu_custom_call.1} parent=89 // loop_footer
                  %s1750 = sadd.s32 %s1748, 1
                $region103: #{tpu_custom_call.1} parent=89 // loop_footer_branch
                  %1747 = sbr.rel target = $region99
                $region104: #{tpu_custom_call.1} parent=89 // loop_exit
                  _
              $region90: #{tpu_custom_call.1} parent=67 // pred_fallthru
                _
              // Predicated region
              $region105: #{tpu_custom_call.1} parent=67 // pred_check
                _
              $region106: #{tpu_custom_call.1} parent=67 // pred_check_branch
                %1766 = sbr.rel target = $region108
              $region107: #{tpu_custom_call.1} parent=67 // pred_region
                _
              $region108: #{tpu_custom_call.1} parent=67 // pred_fallthru
                _
            $region68: #{tpu_custom_call.1} parent=63 // pred_fallthru
              _
            // Predicated region
            $region69: #{tpu_custom_call.1} parent=63 // pred_check
              _
            $region70: #{tpu_custom_call.1} parent=63 // pred_check_branch
              %1420 = sbr.rel target = $region72
            $region71: #{tpu_custom_call.1} parent=63 // pred_region
              %s1422 = ssub.s32 256, 1
              %s1423 = sshrl.u32 %s1409, 6
              // While loop
              $region73: #{tpu_custom_call.1} parent=71 // loop_pre_header
                _
              $region74: #{tpu_custom_call.1} parent=71 // loop_header
                %s1425 = sphi 0, %s1427
                %p1426 = scmp.ge.s32.totalorder %s1425, %s1423
                %s1430 = sphi 0, %s1563
                %s1431 = sphi %s1402, %s1566
                %s1432 = sphi %s1413, %s1567
              $region75: #{tpu_custom_call.1} parent=71 // loop_header_branch
                %1429 = sbr.rel (%p1426) target = $region79
              $region76: #{tpu_custom_call.1} parent=71 // loop_body
                %v1433 = vld [vmem:[%s1431] sm:%s1422]
                %1434 = vst [vmem:[%s1432] sm:%s1422] %v1433
                %v1435 = vld [vmem:[%s1431 + $0x8] sm:%s1422]
                %1436 = vst [vmem:[%s1432 + $0x8] sm:%s1422] %v1435
                %v1437 = vld [vmem:[%s1431 + $0x10] sm:%s1422]
                %1438 = vst [vmem:[%s1432 + $0x10] sm:%s1422] %v1437
                %v1439 = vld [vmem:[%s1431 + $0x18] sm:%s1422]
                %1440 = vst [vmem:[%s1432 + $0x18] sm:%s1422] %v1439
                %v1441 = vld [vmem:[%s1431 + $0x20] sm:%s1422]
                %1442 = vst [vmem:[%s1432 + $0x20] sm:%s1422] %v1441
                %v1443 = vld [vmem:[%s1431 + $0x28] sm:%s1422]
                %1444 = vst [vmem:[%s1432 + $0x28] sm:%s1422] %v1443
                %v1445 = vld [vmem:[%s1431 + $0x30] sm:%s1422]
                %1446 = vst [vmem:[%s1432 + $0x30] sm:%s1422] %v1445
                %v1447 = vld [vmem:[%s1431 + $0x38] sm:%s1422]
                %1448 = vst [vmem:[%s1432 + $0x38] sm:%s1422] %v1447
                %v1449 = vld [vmem:[%s1431 + $0x40] sm:%s1422]
                %1450 = vst [vmem:[%s1432 + $0x40] sm:%s1422] %v1449
                %v1451 = vld [vmem:[%s1431 + $0x48] sm:%s1422]
                %1452 = vst [vmem:[%s1432 + $0x48] sm:%s1422] %v1451
                %v1453 = vld [vmem:[%s1431 + $0x50] sm:%s1422]
                %1454 = vst [vmem:[%s1432 + $0x50] sm:%s1422] %v1453
                %v1455 = vld [vmem:[%s1431 + $0x58] sm:%s1422]
                %1456 = vst [vmem:[%s1432 + $0x58] sm:%s1422] %v1455
                %v1457 = vld [vmem:[%s1431 + $0x60] sm:%s1422]
                %1458 = vst [vmem:[%s1432 + $0x60] sm:%s1422] %v1457
                %v1459 = vld [vmem:[%s1431 + $0x68] sm:%s1422]
                %1460 = vst [vmem:[%s1432 + $0x68] sm:%s1422] %v1459
                %v1461 = vld [vmem:[%s1431 + $0x70] sm:%s1422]
                %1462 = vst [vmem:[%s1432 + $0x70] sm:%s1422] %v1461
                %v1463 = vld [vmem:[%s1431 + $0x78] sm:%s1422]
                %1464 = vst [vmem:[%s1432 + $0x78] sm:%s1422] %v1463
                %v1465 = vld [vmem:[%s1431 + $0x80] sm:%s1422]
                %1466 = vst [vmem:[%s1432 + $0x80] sm:%s1422] %v1465
                %v1467 = vld [vmem:[%s1431 + $0x88] sm:%s1422]
                %1468 = vst [vmem:[%s1432 + $0x88] sm:%s1422] %v1467
                %v1469 = vld [vmem:[%s1431 + $0x90] sm:%s1422]
                %1470 = vst [vmem:[%s1432 + $0x90] sm:%s1422] %v1469
                %v1471 = vld [vmem:[%s1431 + $0x98] sm:%s1422]
                %1472 = vst [vmem:[%s1432 + $0x98] sm:%s1422] %v1471
                %v1473 = vld [vmem:[%s1431 + $0xa0] sm:%s1422]
                %1474 = vst [vmem:[%s1432 + $0xa0] sm:%s1422] %v1473
                %v1475 = vld [vmem:[%s1431 + $0xa8] sm:%s1422]
                %1476 = vst [vmem:[%s1432 + $0xa8] sm:%s1422] %v1475
                %v1477 = vld [vmem:[%s1431 + $0xb0] sm:%s1422]
                %1478 = vst [vmem:[%s1432 + $0xb0] sm:%s1422] %v1477
                %v1479 = vld [vmem:[%s1431 + $0xb8] sm:%s1422]
                %1480 = vst [vmem:[%s1432 + $0xb8] sm:%s1422] %v1479
                %v1481 = vld [vmem:[%s1431 + $0xc0] sm:%s1422]
                %1482 = vst [vmem:[%s1432 + $0xc0] sm:%s1422] %v1481
                %v1483 = vld [vmem:[%s1431 + $0xc8] sm:%s1422]
                %1484 = vst [vmem:[%s1432 + $0xc8] sm:%s1422] %v1483
                %v1485 = vld [vmem:[%s1431 + $0xd0] sm:%s1422]
                %1486 = vst [vmem:[%s1432 + $0xd0] sm:%s1422] %v1485
                %v1487 = vld [vmem:[%s1431 + $0xd8] sm:%s1422]
                %1488 = vst [vmem:[%s1432 + $0xd8] sm:%s1422] %v1487
                %v1489 = vld [vmem:[%s1431 + $0xe0] sm:%s1422]
                %1490 = vst [vmem:[%s1432 + $0xe0] sm:%s1422] %v1489
                %v1491 = vld [vmem:[%s1431 + $0xe8] sm:%s1422]
                %1492 = vst [vmem:[%s1432 + $0xe8] sm:%s1422] %v1491
                %v1493 = vld [vmem:[%s1431 + $0xf0] sm:%s1422]
                %1494 = vst [vmem:[%s1432 + $0xf0] sm:%s1422] %v1493
                %v1495 = vld [vmem:[%s1431 + $0xf8] sm:%s1422]
                %1496 = vst [vmem:[%s1432 + $0xf8] sm:%s1422] %v1495
                %v1497 = vld [vmem:[%s1431 + $0x100] sm:%s1422]
                %1498 = vst [vmem:[%s1432 + $0x100] sm:%s1422] %v1497
                %v1499 = vld [vmem:[%s1431 + $0x108] sm:%s1422]
                %1500 = vst [vmem:[%s1432 + $0x108] sm:%s1422] %v1499
                %v1501 = vld [vmem:[%s1431 + $0x110] sm:%s1422]
                %1502 = vst [vmem:[%s1432 + $0x110] sm:%s1422] %v1501
                %v1503 = vld [vmem:[%s1431 + $0x118] sm:%s1422]
                %1504 = vst [vmem:[%s1432 + $0x118] sm:%s1422] %v1503
                %v1505 = vld [vmem:[%s1431 + $0x120] sm:%s1422]
                %1506 = vst [vmem:[%s1432 + $0x120] sm:%s1422] %v1505
                %v1507 = vld [vmem:[%s1431 + $0x128] sm:%s1422]
                %1508 = vst [vmem:[%s1432 + $0x128] sm:%s1422] %v1507
                %v1509 = vld [vmem:[%s1431 + $0x130] sm:%s1422]
                %1510 = vst [vmem:[%s1432 + $0x130] sm:%s1422] %v1509
                %v1511 = vld [vmem:[%s1431 + $0x138] sm:%s1422]
                %1512 = vst [vmem:[%s1432 + $0x138] sm:%s1422] %v1511
                %v1513 = vld [vmem:[%s1431 + $0x140] sm:%s1422]
                %1514 = vst [vmem:[%s1432 + $0x140] sm:%s1422] %v1513
                %v1515 = vld [vmem:[%s1431 + $0x148] sm:%s1422]
                %1516 = vst [vmem:[%s1432 + $0x148] sm:%s1422] %v1515
                %v1517 = vld [vmem:[%s1431 + $0x150] sm:%s1422]
                %1518 = vst [vmem:[%s1432 + $0x150] sm:%s1422] %v1517
                %v1519 = vld [vmem:[%s1431 + $0x158] sm:%s1422]
                %1520 = vst [vmem:[%s1432 + $0x158] sm:%s1422] %v1519
                %v1521 = vld [vmem:[%s1431 + $0x160] sm:%s1422]
                %1522 = vst [vmem:[%s1432 + $0x160] sm:%s1422] %v1521
                %v1523 = vld [vmem:[%s1431 + $0x168] sm:%s1422]
                %1524 = vst [vmem:[%s1432 + $0x168] sm:%s1422] %v1523
                %v1525 = vld [vmem:[%s1431 + $0x170] sm:%s1422]
                %1526 = vst [vmem:[%s1432 + $0x170] sm:%s1422] %v1525
                %v1527 = vld [vmem:[%s1431 + $0x178] sm:%s1422]
                %1528 = vst [vmem:[%s1432 + $0x178] sm:%s1422] %v1527
                %v1529 = vld [vmem:[%s1431 + $0x180] sm:%s1422]
                %1530 = vst [vmem:[%s1432 + $0x180] sm:%s1422] %v1529
                %v1531 = vld [vmem:[%s1431 + $0x188] sm:%s1422]
                %1532 = vst [vmem:[%s1432 + $0x188] sm:%s1422] %v1531
                %v1533 = vld [vmem:[%s1431 + $0x190] sm:%s1422]
                %1534 = vst [vmem:[%s1432 + $0x190] sm:%s1422] %v1533
                %v1535 = vld [vmem:[%s1431 + $0x198] sm:%s1422]
                %1536 = vst [vmem:[%s1432 + $0x198] sm:%s1422] %v1535
                %v1537 = vld [vmem:[%s1431 + $0x1a0] sm:%s1422]
                %1538 = vst [vmem:[%s1432 + $0x1a0] sm:%s1422] %v1537
                %v1539 = vld [vmem:[%s1431 + $0x1a8] sm:%s1422]
                %1540 = vst [vmem:[%s1432 + $0x1a8] sm:%s1422] %v1539
                %v1541 = vld [vmem:[%s1431 + $0x1b0] sm:%s1422]
                %1542 = vst [vmem:[%s1432 + $0x1b0] sm:%s1422] %v1541
                %v1543 = vld [vmem:[%s1431 + $0x1b8] sm:%s1422]
                %1544 = vst [vmem:[%s1432 + $0x1b8] sm:%s1422] %v1543
                %v1545 = vld [vmem:[%s1431 + $0x1c0] sm:%s1422]
                %1546 = vst [vmem:[%s1432 + $0x1c0] sm:%s1422] %v1545
                %v1547 = vld [vmem:[%s1431 + $0x1c8] sm:%s1422]
                %1548 = vst [vmem:[%s1432 + $0x1c8] sm:%s1422] %v1547
                %v1549 = vld [vmem:[%s1431 + $0x1d0] sm:%s1422]
                %1550 = vst [vmem:[%s1432 + $0x1d0] sm:%s1422] %v1549
                %v1551 = vld [vmem:[%s1431 + $0x1d8] sm:%s1422]
                %1552 = vst [vmem:[%s1432 + $0x1d8] sm:%s1422] %v1551
                %v1553 = vld [vmem:[%s1431 + $0x1e0] sm:%s1422]
                %1554 = vst [vmem:[%s1432 + $0x1e0] sm:%s1422] %v1553
                %v1555 = vld [vmem:[%s1431 + $0x1e8] sm:%s1422]
                %1556 = vst [vmem:[%s1432 + $0x1e8] sm:%s1422] %v1555
                %v1557 = vld [vmem:[%s1431 + $0x1f0] sm:%s1422]
                %1558 = vst [vmem:[%s1432 + $0x1f0] sm:%s1422] %v1557
                %v1559 = vld [vmem:[%s1431 + $0x1f8] sm:%s1422]
                %1560 = vst [vmem:[%s1432 + $0x1f8] sm:%s1422] %v1559
                %s1561 = sadd.s32 1, %s1430
                %p1562 = scmp.ge.s32.totalorder %s1561, %s1423
                %s1563 = scalar_select %p1562, 0, %s1561
                %s1564 = smul.u32 %s1563, 512
                %s1565 = smul.u32 %s1563, 512
                %s1566 = scalar_lea.vmem %s1402, %s1564 [#allocation2]
                %s1567 = scalar_lea.vmem %s1413, %s1565
              $region77: #{tpu_custom_call.1} parent=71 // loop_footer
                %s1427 = sadd.s32 %s1425, 1
              $region78: #{tpu_custom_call.1} parent=71 // loop_footer_branch
                %1424 = sbr.rel target = $region74
              $region79: #{tpu_custom_call.1} parent=71 // loop_exit
                _
              %s1568 = sshrl.u32 %s1409, 6
              %s1569 = sand.u32 %s1409, 63
              %s1570 = smul.u32 %s1568, 64
              %s1571 = smul.u32 8, %s1570
              %s1572 = scalar_lea.vmem %s1402, %s1571 [#allocation2]
              %s1573 = smul.u32 8, %s1570
              %s1574 = scalar_lea.vmem %s1413, %s1573
              // While loop
              $region80: #{tpu_custom_call.1} parent=71 // loop_pre_header
                _
              $region81: #{tpu_custom_call.1} parent=71 // loop_header
                %s1576 = sphi 0, %s1578
                %p1577 = scmp.ge.s32.totalorder %s1576, %s1569
                %s1581 = sphi 0, %s1588
                %s1582 = sphi %s1572, %s1591
                %s1583 = sphi %s1574, %s1592
              $region82: #{tpu_custom_call.1} parent=71 // loop_header_branch
                %1580 = sbr.rel (%p1577) target = $region86
              $region83: #{tpu_custom_call.1} parent=71 // loop_body
                %v1584 = vld [vmem:[%s1582] sm:%s1422]
                %1585 = vst [vmem:[%s1583] sm:%s1422] %v1584
                %s1586 = sadd.s32 1, %s1581
                %p1587 = scmp.ge.s32.totalorder %s1586, %s1569
                %s1588 = scalar_select %p1587, 0, %s1586
                %s1589 = smul.u32 %s1588, 8
                %s1590 = smul.u32 %s1588, 8
                %s1591 = scalar_lea.vmem %s1572, %s1589 [#allocation2]
                %s1592 = scalar_lea.vmem %s1574, %s1590
              $region84: #{tpu_custom_call.1} parent=71 // loop_footer
                %s1578 = sadd.s32 %s1576, 1
              $region85: #{tpu_custom_call.1} parent=71 // loop_footer_branch
                %1575 = sbr.rel target = $region81
              $region86: #{tpu_custom_call.1} parent=71 // loop_exit
                _
            $region72: #{tpu_custom_call.1} parent=63 // pred_fallthru
              _
          $region64: #{tpu_custom_call.1} parent=59 // pred_fallthru
            _
          %1767 = vnop
        $region60: #{tpu_custom_call.1} parent=55 // pred_fallthru
          _
      $region56: #{tpu_custom_call.1} parent=5 // pred_fallthru
        _
      %p1768 = scmp.le.s32.totalorder 2, %s15
      // Predicated region
      $region109: #{tpu_custom_call.1} parent=5 // pred_check
        %p1769 = pneg %p1768
      $region110: #{tpu_custom_call.1} parent=5 // pred_check_branch
        %1771 = sbr.rel (%p1769) target = $region112
      $region111: #{tpu_custom_call.1} parent=5 // pred_region
        %s1772 = ssub.s32 %s15, 2
        // Predicated region
        $region113: #{tpu_custom_call.1} parent=111 // pred_check
          %p1773 = pneg %p238
        $region114: #{tpu_custom_call.1} parent=111 // pred_check_branch
          %1775 = sbr.rel (%p1773) target = $region116
        $region115: #{tpu_custom_call.1} parent=111 // pred_region
          %s1776 = sand.u32 %s223, 1
          %s1777 = sand.u32 %s223, 1
          %s1778 = smul.addr %s1777, 512
          %s1779 = scalar_lea.vmem [#allocation2], %s1778
        $region116: #{tpu_custom_call.1} parent=111 // pred_fallthru
          _
      $region112: #{tpu_custom_call.1} parent=5 // pred_fallthru
        _
    $region6: #{tpu_custom_call.1} parent=1 // loop_footer
      %s19 = sadd.s32 1, %s15
    $region7: #{tpu_custom_call.1} parent=1 // loop_footer_branch
      %14 = sbr.rel target = $region3
    $region8: #{tpu_custom_call.1} parent=1 // loop_exit
      _

</llo_original>
